<compile_context>
chip_gen: v7x
topology: tpu7x:2x2x1
jax: 0.10.0
libtpu: 0.0.40
codegen_flags: <defaults>
</compile_context>

<pallas_src>
import functools

import jax
import jax.numpy as jnp
from jax.experimental import pallas as pl
from jax.experimental.pallas import tpu as pltpu


def _round_up(x, m):
    return (x + m - 1) // m * m


def _pick_tile_h(H, W, target_rows):
    """Largest divisor TH of H with TH*W <= target_rows; keep TH*W 128-aligned if H is split."""
    divs = [d for d in range(1, H + 1) if H % d == 0]
    cands = [d for d in divs if d * W <= target_rows] or [1]
    th = max(cands)
    if th < H and (th * W) % 128 != 0:
        aligned = [d for d in cands if (d * W) % 128 == 0]
        # TODO(synk): for huge images whose row tiles cannot be 128-aligned, fall back to a
        # lane-dense channel-last output layout instead of loading the whole image in one band.
        th = max(aligned) if aligned else H
    return th


def _build_patches(xb, TH, W, Cin, KH, KW):
    # xb: (TH+2, W+2, Cin) bf16 halo block -> (TH*W, KH*KW*Cin) im2col tile, k = (dy, dx, ci).
    # Static slices only; concatenate in f32 (robust unaligned minor-dim concat), feed MXU in bf16.
    taps = [xb[dy:dy + TH, dx:dx + W, :].astype(jnp.float32).reshape(TH * W, Cin)
            for dy in range(KH) for dx in range(KW)]
    return jnp.concatenate(taps, axis=-1).astype(jnp.bfloat16)


def _stats_kernel(x_ref, w_ref, part_ref, *, TH, W, Cin, KH, KW):
    # Stats-only pass: conv tile stays in VMEM/vregs, only (2, Cp) partials go back to HBM.
    patch = _build_patches(x_ref[0, 0], TH, W, Cin, KH, KW)
    conv = jnp.dot(patch, w_ref[...], preferred_element_type=jnp.float32)   # (THW, Cp) f32
    s = jnp.sum(conv, axis=0, keepdims=True)                                # (1, Cp) tile sum
    mu = s * (1.0 / (TH * W))
    d = conv - mu
    m2 = jnp.sum(d * d, axis=0, keepdims=True)                              # centered sum of squares
    part_ref[0, 0] = jnp.concatenate([s, m2], axis=0)                       # (2, Cp)


def _fused_kernel(x_ref, w_ref, scale_ref, shift_ref, out_ref, *, TH, W, Cin, KH, KW, Cout_pad):
    # Recompute conv, then BN + ReLU + dropout2d as the epilogue; store NCHW tiles (HW on lanes).
    patch = _build_patches(x_ref[0, 0], TH, W, Cin, KH, KW)
    conv = jnp.dot(patch, w_ref[...], preferred_element_type=jnp.float32)   # (THW, Cp) f32
    y = jnp.maximum(conv * scale_ref[0] + shift_ref[0], 0.0)                # BN affine + ReLU + keep
    yt = jnp.transpose(y)                                                   # (Cp, THW) via XLU
    out_ref[0] = yt[:Cout_pad, :].astype(out_ref.dtype)


def conv_block_forward(x_nchw, weight_oihw, gamma, beta, keep_scale_nc,
                       *, eps=1e-5, target_rows=1024, out_dtype=jnp.float32):
    """x_nchw: (N, Cin, H, W); weight_oihw: (Cout, Cin, 3, 3); keep_scale_nc: (N, Cout)."""
    N, Cin, H, W = x_nchw.shape
    Cout, Cin_w, KH, KW = weight_oihw.shape
    assert Cin_w == Cin
    K = KH * KW * Cin
    Cp = 128 if Cout <= 128 else _round_up(Cout, 256)    # lane dim; 256-align big Cout (v6e/v7x MXU)
    Cout_pad = _round_up(Cout, 8)
    pad = (KH - 1) // 2                                   # = 1 for the 3x3 / padding=1 block

    TH = _pick_tile_h(H, W, target_rows)
    n_h = H // TH
    THW = TH * W

    # ---- glue: NHWC bf16 halo + overlapping row bands (only +2 halo rows per band duplicated) ----
    x_nhwc = jnp.transpose(x_nchw, (0, 2, 3, 1)).astype(jnp.bfloat16)
    x_halo = jnp.pad(x_nhwc, ((0, 0), (pad, pad), (pad, pad), (0, 0)))
    x_bands = jnp.stack([x_halo[:, t * TH: t * TH + TH + 2 * pad] for t in range(n_h)],
                        axis=1)                                    # (N, n_h, TH+2, W+2, Cin)

    # ---- weights: (Cout, Cin, KH, KW) -> (K, Cp) with k = (dy, dx, ci), matching _build_patches ----
    w2 = jnp.transpose(weight_oihw.astype(jnp.float32), (2, 3, 1, 0)).reshape(K, Cout)
    w2 = jnp.pad(w2, ((0, 0), (0, Cp - Cout))).astype(jnp.bfloat16)

    cparams = pltpu.CompilerParams(
        dimension_semantics=("parallel", "parallel"),
        vmem_limit_bytes=32 * 1024 * 1024)                 # v7x-safe (64 MiB physical VMEM / TC)

    # ---- pass 1: stats only (per-band sum + centered sumsq); no conv activation written ----
    stats = functools.partial(_stats_kernel, TH=TH, W=W, Cin=Cin, KH=KH, KW=KW)
    partials = pl.pallas_call(
        stats,
        out_shape=jax.ShapeDtypeStruct((N, n_h, 2, Cp), jnp.float32),
        grid_spec=pltpu.PrefetchScalarGridSpec(
            num_scalar_prefetch=0,
            grid=(N, n_h),
            in_specs=[
                pl.BlockSpec((1, 1, TH + 2 * pad, W + 2 * pad, Cin),
                             lambda n, t: (n, t, 0, 0, 0)),
                pl.BlockSpec((K, Cp), lambda n, t: (0, 0)),
            ],
            out_specs=pl.BlockSpec((1, 1, 2, Cp), lambda n, t: (n, t, 0, 0)),
        ),
        compiler_params=cparams,
    )(x_bands, w2)

    # ---- glue: Chan-style combine of per-tile (sum, M2) -> batch mean / inv_std; fold dropout ----
    M = N * H * W                                          # every tile row is a valid pixel (TH | H)
    s_t = partials[:, :, 0, :]                             # (N, n_h, Cp)
    m2_t = partials[:, :, 1, :]
    mean = jnp.sum(s_t, axis=(0, 1)) / M
    mu_t = s_t / float(THW)
    M2 = jnp.sum(m2_t, axis=(0, 1)) + float(THW) * jnp.sum((mu_t - mean) ** 2, axis=(0, 1))
    var = M2 / M                                           # biased batch variance (training-mode BN)
    inv_std = jax.lax.rsqrt(var + eps)

    gamma_p = jnp.pad(gamma.astype(jnp.float32), (0, Cp - Cout))
    beta_p = jnp.pad(beta.astype(jnp.float32), (0, Cp - Cout))
    scale_c = gamma_p * inv_std
    shift_c = beta_p - mean * scale_c
    keep_p = jnp.pad(keep_scale_nc.astype(jnp.float32), ((0, 0), (0, Cp - Cout)))
    # keep >= 0, so relu(y) * keep == relu(y * keep): fold dropout2d into per-(sample,ch) scale/shift.
    scale2 = (scale_c[None, :] * keep_p).reshape(N, 1, Cp)
    shift2 = (shift_c[None, :] * keep_p).reshape(N, 1, Cp)

    # ---- pass 2: recompute conv + BN + ReLU + dropout2d, NCHW-tile (lane-dense HW) stores ----
    fused = functools.partial(_fused_kernel, TH=TH, W=W, Cin=Cin, KH=KH, KW=KW, Cout_pad=Cout_pad)
    out_flat = pl.pallas_call(
        fused,
        out_shape=jax.ShapeDtypeStruct((N, Cout_pad, H * W), out_dtype),
        grid_spec=pltpu.PrefetchScalarGridSpec(
            num_scalar_prefetch=0,
            grid=(N, n_h),
            in_specs=[
                pl.BlockSpec((1, 1, TH + 2 * pad, W + 2 * pad, Cin),
                             lambda n, t: (n, t, 0, 0, 0)),
                pl.BlockSpec((K, Cp), lambda n, t: (0, 0)),
                pl.BlockSpec((1, 1, Cp), lambda n, t: (n, 0, 0)),
                pl.BlockSpec((1, 1, Cp), lambda n, t: (n, 0, 0)),
            ],
            out_specs=pl.BlockSpec((1, Cout_pad, THW), lambda n, t: (n, 0, t)),
        ),
        compiler_params=cparams,
    )(x_bands, w2, scale2, shift2)

    # Output is already channel-major: just drop channel padding and restore (H, W).
    return out_flat[:, :Cout, :].reshape(N, Cout, H, W)


def reference_forward(x_nchw, weight_oihw, gamma, beta, keep_scale_nc, *, eps=1e-5):
    """Plain-JAX reference (same semantics, same dropout mask) for a sanity check."""
    conv = jax.lax.conv_general_dilated(
        x_nchw.astype(jnp.float32), weight_oihw.astype(jnp.float32),
        window_strides=(1, 1), padding=((1, 1), (1, 1)),
        dimension_numbers=("NCHW", "OIHW", "NCHW"))
    mean = jnp.mean(conv, axis=(0, 2, 3), keepdims=True)
    var = jnp.mean((conv - mean) ** 2, axis=(0, 2, 3), keepdims=True)
    y = (conv - mean) * jax.lax.rsqrt(var + eps)
    y = y * gamma[None, :, None, None] + beta[None, :, None, None]
    y = jnp.maximum(y, 0.0)
    return y * keep_scale_nc[:, :, None, None]


if __name__ == "__main__":
    N, Cin, H, W = 2, 4, 16, 16
    Cout = 8
    p_drop = 0.1

    key = jax.random.PRNGKey(0)
    kx, kw, kd = jax.random.split(key, 3)

    x = jax.random.normal(kx, (N, Cin, H, W), dtype=jnp.float32)

    # Conv weight: kaiming_normal_ with nonlinearity='relu' -> std = sqrt(2 / fan_in)
    fan_in = Cin * 3 * 3
    w = jax.random.normal(kw, (Cout, Cin, 3, 3), dtype=jnp.float32) * jnp.sqrt(2.0 / fan_in)

    # BatchNorm params: weight=0.5, bias=0 (per torch init in __init__)
    gamma = jnp.full((Cout,), 0.5, dtype=jnp.float32)
    beta = jnp.zeros((Cout,), dtype=jnp.float32)

    # F.dropout2d(p=0.1) in training mode: Bernoulli(keep=0.9) per (sample, channel), survivors
    # scaled by 1/(1-p).  Mask drawn deterministically with JAX RNG (torch RNG not reproducible).
    keep_mask = jax.random.bernoulli(kd, 1.0 - p_drop, (N, Cout)).astype(jnp.float32)
    keep_scale = keep_mask / (1.0 - p_drop)

    out = conv_block_forward(x, w, gamma, beta, keep_scale)
    out = jax.block_until_ready(out)

    ref = reference_forward(x, w, gamma, beta, keep_scale)
    assert out.shape == (N, Cout, H, W)
    assert jnp.allclose(out, ref, atol=5e-2, rtol=5e-2), float(jnp.max(jnp.abs(out - ref)))

    print("KERNEL_OK")
</pallas_src>

<mosaic_0001>
module attributes {stable_mosaic.version = 11 : i64} {
  func.func @_stats_kernel(%arg0: i32, %arg1: i32, %arg2: memref<1x1x18x18x4xbf16, #tpu.memory_space<vmem>>, %arg3: memref<36x128xbf16, #tpu.memory_space<vmem>>, %arg4: memref<1x1x2x128xf32, #tpu.memory_space<vmem>>) attributes {dimension_semantics = [#tpu.dimension_semantics<parallel>, #tpu.dimension_semantics<parallel>], iteration_bounds = array<i64: 2, 1>, scalar_prefetch = 0 : i64, scratch_operands = 0 : i64, tpu.core_type = #tpu.core_type<tc>, window_params = [{transform_indices = @transform_0, window_bounds = array<i64: 1, 1, 18, 18, 4>}, {pipeline_mode = #tpu.pipeline_mode<synchronous>, transform_indices = @transform_1, window_bounds = array<i64: 36, 128>}, {transform_indices = @transform_2, window_bounds = array<i64: 1, 1, 2, 128>}]} {
    %c0 = arith.constant 0 : index
    %c0_0 = arith.constant 0 : index
    %c0_1 = arith.constant 0 : index
    %c0_2 = arith.constant 0 : index
    %c0_3 = arith.constant 0 : index
    %0 = vector.load %arg2[%c0, %c0_0, %c0_1, %c0_2, %c0_3] : memref<1x1x18x18x4xbf16, #tpu.memory_space<vmem>>, vector<1x1x18x18x4xbf16>
    %1 = vector.shape_cast %0 : vector<1x1x18x18x4xbf16> to vector<18x18x4xbf16>
    %2 = vector.extract_strided_slice %1 {offsets = [0, 0, 0], sizes = [16, 16, 4], strides = [1, 1, 1]} : vector<18x18x4xbf16> to vector<16x16x4xbf16>
    %3 = arith.extf %2 : vector<16x16x4xbf16> to vector<16x16x4xf32>
    %4 = vector.shape_cast %3 : vector<16x16x4xf32> to vector<256x4xf32>
    %5 = vector.extract_strided_slice %1 {offsets = [0, 1, 0], sizes = [16, 16, 4], strides = [1, 1, 1]} : vector<18x18x4xbf16> to vector<16x16x4xbf16>
    %6 = arith.extf %5 : vector<16x16x4xbf16> to vector<16x16x4xf32>
    %7 = vector.shape_cast %6 : vector<16x16x4xf32> to vector<256x4xf32>
    %8 = vector.extract_strided_slice %1 {offsets = [0, 2, 0], sizes = [16, 16, 4], strides = [1, 1, 1]} : vector<18x18x4xbf16> to vector<16x16x4xbf16>
    %9 = arith.extf %8 : vector<16x16x4xbf16> to vector<16x16x4xf32>
    %10 = vector.shape_cast %9 : vector<16x16x4xf32> to vector<256x4xf32>
    %11 = vector.extract_strided_slice %1 {offsets = [1, 0, 0], sizes = [16, 16, 4], strides = [1, 1, 1]} : vector<18x18x4xbf16> to vector<16x16x4xbf16>
    %12 = arith.extf %11 : vector<16x16x4xbf16> to vector<16x16x4xf32>
    %13 = vector.shape_cast %12 : vector<16x16x4xf32> to vector<256x4xf32>
    %14 = vector.extract_strided_slice %1 {offsets = [1, 1, 0], sizes = [16, 16, 4], strides = [1, 1, 1]} : vector<18x18x4xbf16> to vector<16x16x4xbf16>
    %15 = arith.extf %14 : vector<16x16x4xbf16> to vector<16x16x4xf32>
    %16 = vector.shape_cast %15 : vector<16x16x4xf32> to vector<256x4xf32>
    %17 = vector.extract_strided_slice %1 {offsets = [1, 2, 0], sizes = [16, 16, 4], strides = [1, 1, 1]} : vector<18x18x4xbf16> to vector<16x16x4xbf16>
    %18 = arith.extf %17 : vector<16x16x4xbf16> to vector<16x16x4xf32>
    %19 = vector.shape_cast %18 : vector<16x16x4xf32> to vector<256x4xf32>
    %20 = vector.extract_strided_slice %1 {offsets = [2, 0, 0], sizes = [16, 16, 4], strides = [1, 1, 1]} : vector<18x18x4xbf16> to vector<16x16x4xbf16>
    %21 = arith.extf %20 : vector<16x16x4xbf16> to vector<16x16x4xf32>
    %22 = vector.shape_cast %21 : vector<16x16x4xf32> to vector<256x4xf32>
    %23 = vector.extract_strided_slice %1 {offsets = [2, 1, 0], sizes = [16, 16, 4], strides = [1, 1, 1]} : vector<18x18x4xbf16> to vector<16x16x4xbf16>
    %24 = arith.extf %23 : vector<16x16x4xbf16> to vector<16x16x4xf32>
    %25 = vector.shape_cast %24 : vector<16x16x4xf32> to vector<256x4xf32>
    %26 = vector.extract_strided_slice %1 {offsets = [2, 2, 0], sizes = [16, 16, 4], strides = [1, 1, 1]} : vector<18x18x4xbf16> to vector<16x16x4xbf16>
    %27 = arith.extf %26 : vector<16x16x4xbf16> to vector<16x16x4xf32>
    %28 = vector.shape_cast %27 : vector<16x16x4xf32> to vector<256x4xf32>
    %29 = tpu.concatenate %4, %7, %10, %13, %16, %19, %22, %25, %28 in 1 : vector<256x4xf32>, vector<256x4xf32>, vector<256x4xf32>, vector<256x4xf32>, vector<256x4xf32>, vector<256x4xf32>, vector<256x4xf32>, vector<256x4xf32>, vector<256x4xf32> -> vector<256x36xf32>
    %30 = arith.truncf %29 : vector<256x36xf32> to vector<256x36xbf16>
    %c0_4 = arith.constant 0 : index
    %c0_5 = arith.constant 0 : index
    %31 = vector.load %arg3[%c0_4, %c0_5] : memref<36x128xbf16, #tpu.memory_space<vmem>>, vector<36x128xbf16>
    %cst = arith.constant dense<0.000000e+00> : vector<256x128xf32>
    %32 = tpu.matmul %30, %31, %cst {dimension_numbers = #tpu.dot_dimension_numbers<[1], [0], [0], [1], [0, 0, 1, 1], [], []>} : vector<256x36xbf16>, vector<36x128xbf16>, vector<256x128xf32> -> vector<256x128xf32>
    %cst_6 = arith.constant dense<0.000000e+00> : vector<128xf32>
    %33 = vector.multi_reduction <add>, %32, %cst_6 [0] : vector<256x128xf32> to vector<128xf32>
    %34 = vector.shape_cast %33 : vector<128xf32> to vector<1x128xf32>
    %cst_7 = arith.constant 3.906250e-03 : f32
    %35 = vector.broadcast %cst_7 : f32 to vector<1x128xf32>
    %36 = arith.mulf %34, %35 : vector<1x128xf32>
    %37 = vector.broadcast %36 : vector<1x128xf32> to vector<256x128xf32>
    %38 = arith.subf %32, %37 : vector<256x128xf32>
    %39 = arith.mulf %38, %38 : vector<256x128xf32>
    %cst_8 = arith.constant dense<0.000000e+00> : vector<128xf32>
    %40 = vector.multi_reduction <add>, %39, %cst_8 [0] : vector<256x128xf32> to vector<128xf32>
    %41 = vector.shape_cast %40 : vector<128xf32> to vector<1x128xf32>
    %42 = tpu.concatenate %34, %41 in 0 : vector<1x128xf32>, vector<1x128xf32> -> vector<2x128xf32>
    %c0_9 = arith.constant 0 : index
    %c0_10 = arith.constant 0 : index
    %c0_11 = arith.constant 0 : index
    %c0_12 = arith.constant 0 : index
    %43 = vector.load %arg4[%c0_9, %c0_10, %c0_11, %c0_12] : memref<1x1x2x128xf32, #tpu.memory_space<vmem>>, vector<1x1x2x128xf32>
    %44 = vector.shape_cast %43 : vector<1x1x2x128xf32> to vector<2x128xf32>
    %45 = vector.shape_cast %42 : vector<2x128xf32> to vector<1x1x2x128xf32>
    tpu.vector_store %arg4[%c0_9, %c0_10, %c0_11, %c0_12], %45 {strides = array<i32>} : memref<1x1x2x128xf32, #tpu.memory_space<vmem>>, vector<1x1x2x128xf32>,
    return
  }
  func.func @transform_0(%arg0: i32, %arg1: i32) -> (i32, i32, i32, i32, i32) {
    %c0_i32 = arith.constant 0 : i32
    %c0_i32_0 = arith.constant 0 : i32
    %c0_i32_1 = arith.constant 0 : i32
    %c0_i32_2 = arith.constant 0 : i32
    return %arg0, %arg1, %c0_i32, %c0_i32_0, %c0_i32_1 : i32, i32, i32, i32, i32
  }
  func.func @transform_1(%arg0: i32, %arg1: i32) -> (i32, i32) {
    %c0_i32 = arith.constant 0 : i32
    %c0_i32_0 = arith.constant 0 : i32
    %c0_i32_1 = arith.constant 0 : i32
    return %c0_i32, %c0_i32_0 : i32, i32
  }
  func.func @transform_2(%arg0: i32, %arg1: i32) -> (i32, i32, i32, i32) {
    %c0_i32 = arith.constant 0 : i32
    %c0_i32_0 = arith.constant 0 : i32
    %c0_i32_1 = arith.constant 0 : i32
    return %arg0, %arg1, %c0_i32, %c0_i32_0 : i32, i32, i32, i32
  }
}

</mosaic_0001>

<llo_original>
// kernel: tpu_custom_call.1
$region0: #{tpu_custom_call.1}
  #allocation0 [shape = 'u32[]', space=smem, size = 0x4, offset = 0x4, fixed_abs, tag = 'smem constant byte address 0x4 - core index']
  #allocation1 [shape = 'u32[144,128]{1,0:T(1,128)}', space=vmem, size = 0x12000, scoped, tag = 'internal scratch']
  %s0 = inlined_call_operand.vmem [shape: bf16[2,1,18,18,4], index: 0, kind: input, shape index: {}]
  %s1 = inlined_call_operand.vmem [shape: bf16[36,128], index: 1, kind: input, shape index: {}]
  %s2 = inlined_call_operand.hbm [shape: f32[2,1,2,128], index: 2, kind: output, shape index: {}]
  %s3 = sld [smem:[#allocation0]]
  $region41: #{tpu_custom_call.1} parent=0
    _
  %s5 = ssub.s32 1, %s3
  %s6 = scalar_select 0, %s5, %s3
  $region1: #{tpu_custom_call.1} parent=0
    #allocation2 [shape = 'u8[2048]{0}', space=vmem, size = 0x800, scoped, tag = 'output window, operand 0']
    #allocation3 [shape = 's32[2]{0}', space=sflag, size = 0x8, scoped, tag = 'scoped memory for tpu_custom_call.1']
    %7 = vsyncpa [#allocation3], 0
    %s8 = scalar_lea.sflag [#allocation3], 1
    %9 = vsyncpa %s8, 0
    loop: start=0, step=1, limit=4
    $region2: #{tpu_custom_call.1} parent=1 // loop_pre_header
      _
    $region3: #{tpu_custom_call.1} parent=1 // loop_header
      %s11 = sphi 0, %s15
      %p12 = scmp.ge.s32.totalorder %s11, 4
      %s18 = sphi 0, %s30
      %s19 = sphi 0, %s26
      %s20 = sphi 0, %s18
      %s21 = sphi 0, %s19
      %s22 = sphi 0, %s20
      %s23 = sphi 0, %s21
      %s35 = sphi 0, %s37
      %s38 = sphi 0, %s35
      %s39 = sphi 0, %s38
      %s55 = sphi 0, %s39
      %s59 = sphi 0, %s59
      %s61 = sphi 0, %s59
      %s62 = sphi 0, %s61
      %s76 = sphi 0, %s62
      %s84 = sphi 0, %s86
      %s87 = sphi 0, %s84
      %s88 = sphi 0, %s87
      %s104 = sphi 0, %s88
    $region4: #{tpu_custom_call.1} parent=1 // loop_header_branch
      %14 = sbr.rel (%p12) target = $region8
    $region5: #{tpu_custom_call.1} parent=1 // loop_body
      %s16 = ssub.s32 %s11, 1
      %s17 = ssub.s32 %s11, 2
      %s24 = sadd.s32 1, %s19
      %p25 = scmp.ge.s32.totalorder %s24, 1
      %s26 = scalar_select %p25, 0, %s24
      %s27 = sadd.s32 1, %s18
      %s28 = scalar_select %p25, %s27, %s18
      %p29 = scmp.ge.s32.totalorder %s28, 2
      %s30 = scalar_select %p29, 0, %s28
      %s31 = ssub.s32 %s18, %s30
      %s32 = ssub.s32 %s19, %s26
      %s33 = sor.u32 %s31, %s32
      %p34 = scmp.eq.s32.totalorder %s33, 0
      %s36 = sadd.s32 %s35, 1
      %s37 = scalar_select %p34, %s35, %s36
      %p40 = pneg %p34
      %p41 = scmp.eq.s32.totalorder %s11, 1
      %p42 = por %p40, %p41
      %p43 = scmp.ne.s32.totalorder %s35, %s38
      %p44 = scmp.eq.s32.totalorder %s11, 0
      %p45 = por %p43, %p44
      %p46 = scmp.ne.s32.totalorder %s35, %s38
      %p47 = scmp.eq.s32.totalorder %s16, 1
      %p48 = por %p46, %p47
      %p49 = scmp.ne.s32.totalorder %s38, %s39
      %p50 = scmp.eq.s32.totalorder %s16, 0
      %p51 = por %p49, %p50
      %p52 = scmp.ne.s32.totalorder %s38, %s39
      %p53 = scmp.eq.s32.totalorder %s17, 1
      %p54 = por %p52, %p53
      %p56 = scmp.ne.s32.totalorder %s39, %s55
      %p57 = scmp.eq.s32.totalorder %s17, 0
      %p58 = por %p56, %p57
      %s60 = sadd.s32 %s59, 1
      %p63 = scmp.eq.s32.totalorder %s11, 1
      %p64 = scmp.ne.s32.totalorder %s59, %s61
      %p65 = scmp.eq.s32.totalorder %s11, 0
      %p66 = por %p64, %p65
      %p67 = scmp.ne.s32.totalorder %s59, %s61
      %p68 = scmp.eq.s32.totalorder %s16, 1
      %p69 = por %p67, %p68
      %p70 = scmp.ne.s32.totalorder %s61, %s62
      %p71 = scmp.eq.s32.totalorder %s16, 0
      %p72 = por %p70, %p71
      %p73 = scmp.ne.s32.totalorder %s61, %s62
      %p74 = scmp.eq.s32.totalorder %s17, 1
      %p75 = por %p73, %p74
      %p77 = scmp.ne.s32.totalorder %s62, %s76
      %p78 = scmp.eq.s32.totalorder %s17, 0
      %p79 = por %p77, %p78
      %s80 = ssub.s32 %s18, %s30
      %s81 = ssub.s32 %s19, %s26
      %s82 = sor.u32 %s80, %s81
      %p83 = scmp.eq.s32.totalorder %s82, 0
      %s85 = sadd.s32 %s84, 1
      %s86 = scalar_select %p83, %s84, %s85
      %p89 = pneg %p83
      %p90 = scmp.eq.s32.totalorder %s11, 1
      %p91 = por %p89, %p90
      %p92 = scmp.ne.s32.totalorder %s84, %s87
      %p93 = scmp.eq.s32.totalorder %s11, 0
      %p94 = por %p92, %p93
      %p95 = scmp.ne.s32.totalorder %s84, %s87
      %p96 = scmp.eq.s32.totalorder %s16, 1
      %p97 = por %p95, %p96
      %p98 = scmp.ne.s32.totalorder %s87, %s88
      %p99 = scmp.eq.s32.totalorder %s16, 0
      %p100 = por %p98, %p99
      %p101 = scmp.ne.s32.totalorder %s87, %s88
      %p102 = scmp.eq.s32.totalorder %s17, 1
      %p103 = por %p101, %p102
      %p105 = scmp.ne.s32.totalorder %s88, %s104
      %p106 = scmp.eq.s32.totalorder %s17, 0
      %p107 = por %p105, %p106
      %p108 = scmp.le.s32.totalorder 1, %s11
      %p109 = scmp.lt.s32.totalorder %s11, 3
      %p110 = pnand %p108, %p109
      %p111 = pneg %p110
      // Predicated region
      $region9: #{tpu_custom_call.1} parent=5 // pred_check
        _
      $region10: #{tpu_custom_call.1} parent=5 // pred_check_branch
        %113 = sbr.rel (%p110) target = $region12
      $region11: #{tpu_custom_call.1} parent=5 // pred_region
        %s114 = ssub.s32 %s11, 1
        // Predicated region
        $region13: #{tpu_custom_call.1} parent=11 // pred_check
          %p115 = pneg %p72
        $region14: #{tpu_custom_call.1} parent=11 // pred_check_branch
          %117 = sbr.rel (%p115) target = $region16
        $region15: #{tpu_custom_call.1} parent=11 // pred_region
          _
        $region16: #{tpu_custom_call.1} parent=11 // pred_fallthru
          _
      $region12: #{tpu_custom_call.1} parent=5 // pred_fallthru
        _
      %p118 = scmp.lt.s32.totalorder %s11, 2
      // Predicated region
      $region17: #{tpu_custom_call.1} parent=5 // pred_check
        %p119 = pneg %p118
      $region18: #{tpu_custom_call.1} parent=5 // pred_check_branch
        %121 = sbr.rel (%p119) target = $region20
      $region19: #{tpu_custom_call.1} parent=5 // pred_region
        // Predicated region
        $region21: #{tpu_custom_call.1} parent=19 // pred_check
          %p122 = pneg %p45
        $region22: #{tpu_custom_call.1} parent=19 // pred_check_branch
          %124 = sbr.rel (%p122) target = $region24
        $region23: #{tpu_custom_call.1} parent=19 // pred_region
          %p125 = scmp.lt.s32.totalorder %s18, 1
          %s126 = scalar_select %p125, %s18, 1
          %p127 = scmp.lt.s32.totalorder %s19, 0
          %s128 = scalar_select %p127, %s19, 0
          %s129 = smul.addr %s128, 54
          %s130 = smul.addr %s126, 54
          %s131 = sadd.s32 %s129, %s130
          %s132 = smul.addr %s131, 4
          %s133 = scalar_lea.vmem %s0, %s132
        $region24: #{tpu_custom_call.1} parent=19 // pred_fallthru
          _
      $region20: #{tpu_custom_call.1} parent=5 // pred_fallthru
        _
      %p134 = scmp.le.s32.totalorder 1, %s11
      %p135 = scmp.lt.s32.totalorder %s11, 3
      %p136 = pnand %p134, %p135
      %p137 = pneg %p136
      // Predicated region
      $region25: #{tpu_custom_call.1} parent=5 // pred_check
        _
      $region26: #{tpu_custom_call.1} parent=5 // pred_check_branch
        %139 = sbr.rel (%p136) target = $region28
      $region27: #{tpu_custom_call.1} parent=5 // pred_region
        %s140 = ssub.s32 %s11, 1
        %p141 = scmp.lt.s32.totalorder %s20, 1
        %s142 = scalar_select %p141, %s20, 1
        %p143 = scmp.lt.s32.totalorder %s21, 0
        %s144 = scalar_select %p143, %s21, 0
        %s145 = smul.addr %s144, 54
        %s146 = smul.addr %s142, 54
        %s147 = sadd.s32 %s145, %s146
        %s148 = smul.addr %s147, 4
        %s149 = scalar_lea.vmem %s0, %s148
        %p150 = pneg %p51
        %p151 = pneg %p48
        %p152 = pneg %p72
        %p153 = pneg %p69
        %p154 = pneg %p100
        %p155 = pneg %p97
        %s156 = sand.u32 %s87, 1
        %s157 = scalar_lea.sflag [#allocation3], %s156
        %s158 = sand.u32 %s87, 1
        %s159 = smul.addr %s158, 2
        %s160 = scalar_lea.vmem [#allocation2], %s159
        %p161 = scmp.lt.s32.totalorder %s20, 1
        %s162 = scalar_select %p161, %s20, 1
        %p163 = scmp.lt.s32.totalorder %s21, 0
        %s164 = scalar_select %p163, %s21, 0
        %s165 = smul.addr %s164, 54
        %s166 = smul.addr %s162, 54
        %s167 = sadd.s32 %s165, %s166
        %s168 = smul.addr %s167, 4
        %s169 = scalar_lea.vmem %s0, %s168
        %v171 = vld [vmem:[%s169] sm:$0xf]
        %v172 = vld [vmem:[%s169 + $0x4] sm:$0xf]
        %v173 = vld [vmem:[%s169 + $0x8] sm:$0x1]
        %v174 = vld [vmem:[%s169 + $0xc] sm:$0xf]
        %v175 = vld [vmem:[%s169 + $0x10] sm:$0xf]
        %v176 = vld [vmem:[%s169 + $0x14] sm:$0x1]
        %v177 = vld [vmem:[%s169 + $0x18] sm:$0xf]
        %v178 = vld [vmem:[%s169 + $0x1c] sm:$0xf]
        %v179 = vld [vmem:[%s169 + $0x20] sm:$0x1]
        %v180 = vld [vmem:[%s169 + $0x24] sm:$0xf]
        %v181 = vld [vmem:[%s169 + $0x28] sm:$0xf]
        %v182 = vld [vmem:[%s169 + $0x2c] sm:$0x1]
        %v183 = vld [vmem:[%s169 + $0x30] sm:$0xf]
        %v184 = vld [vmem:[%s169 + $0x34] sm:$0xf]
        %v185 = vld [vmem:[%s169 + $0x38] sm:$0x1]
        %v186 = vld [vmem:[%s169 + $0x3c] sm:$0xf]
        %v187 = vld [vmem:[%s169 + $0x40] sm:$0xf]
        %v188 = vld [vmem:[%s169 + $0x44] sm:$0x1]
        %v189 = vld [vmem:[%s169 + $0x48] sm:$0xf]
        %v190 = vld [vmem:[%s169 + $0x4c] sm:$0xf]
        %v191 = vld [vmem:[%s169 + $0x50] sm:$0x1]
        %v192 = vld [vmem:[%s169 + $0x54] sm:$0xf]
        %v193 = vld [vmem:[%s169 + $0x58] sm:$0xf]
        %v194 = vld [vmem:[%s169 + $0x5c] sm:$0x1]
        %v195 = vld [vmem:[%s169 + $0x60] sm:$0xf]
        %v196 = vld [vmem:[%s169 + $0x64] sm:$0xf]
        %v197 = vld [vmem:[%s169 + $0x68] sm:$0x1]
        %v198 = vld [vmem:[%s169 + $0x6c] sm:$0xf]
        %v199 = vld [vmem:[%s169 + $0x70] sm:$0xf]
        %v200 = vld [vmem:[%s169 + $0x74] sm:$0x1]
        %v201 = vld [vmem:[%s169 + $0x78] sm:$0xf]
        %v202 = vld [vmem:[%s169 + $0x7c] sm:$0xf]
        %v203 = vld [vmem:[%s169 + $0x80] sm:$0x1]
        %v204 = vld [vmem:[%s169 + $0x84] sm:$0xf]
        %v205 = vld [vmem:[%s169 + $0x88] sm:$0xf]
        %v206 = vld [vmem:[%s169 + $0x8c] sm:$0x1]
        %v207 = vld [vmem:[%s169 + $0x90] sm:$0xf]
        %v208 = vld [vmem:[%s169 + $0x94] sm:$0xf]
        %v209 = vld [vmem:[%s169 + $0x98] sm:$0x1]
        %v210 = vld [vmem:[%s169 + $0x9c] sm:$0xf]
        %v211 = vld [vmem:[%s169 + $0xa0] sm:$0xf]
        %v212 = vld [vmem:[%s169 + $0xa4] sm:$0x1]
        %v213 = vld [vmem:[%s169 + $0xa8] sm:$0xf]
        %v214 = vld [vmem:[%s169 + $0xac] sm:$0xf]
        %v215 = vld [vmem:[%s169 + $0xb0] sm:$0x1]
        %v216 = vld [vmem:[%s169 + $0xb4] sm:$0xf]
        %v217 = vld [vmem:[%s169 + $0xb8] sm:$0xf]
        %v218 = vld [vmem:[%s169 + $0xbc] sm:$0x1]
        %v219 = vld [vmem:[%s169 + $0xc0] sm:$0xf]
        %v220 = vld [vmem:[%s169 + $0xc4] sm:$0xf]
        %v221 = vld [vmem:[%s169 + $0xc8] sm:$0x1]
        %v222 = vld [vmem:[%s169 + $0xcc] sm:$0xf]
        %v223 = vld [vmem:[%s169 + $0xd0] sm:$0xf]
        %v224 = vld [vmem:[%s169 + $0xd4] sm:$0x1]
        %v225 = vunpack.c.l.bf16 %v171
        %v226 = vunpack.c.l.bf16 %v172
        %v227 = vunpack.c.l.bf16 %v174
        %v228 = vunpack.c.l.bf16 %v175
        %v229 = vunpack.c.l.bf16 %v177
        %v230 = vunpack.c.l.bf16 %v178
        %v231 = vunpack.c.l.bf16 %v180
        %v232 = vunpack.c.l.bf16 %v181
        %v233 = vunpack.c.l.bf16 %v183
        %v234 = vunpack.c.l.bf16 %v184
        %v235 = vunpack.c.l.bf16 %v186
        %v236 = vunpack.c.l.bf16 %v187
        %v237 = vunpack.c.l.bf16 %v189
        %v238 = vunpack.c.l.bf16 %v190
        %v239 = vunpack.c.l.bf16 %v192
        %v240 = vunpack.c.l.bf16 %v193
        %v241 = vunpack.c.l.bf16 %v195
        %v242 = vunpack.c.l.bf16 %v196
        %v243 = vunpack.c.l.bf16 %v198
        %v244 = vunpack.c.l.bf16 %v199
        %v245 = vunpack.c.l.bf16 %v201
        %v246 = vunpack.c.l.bf16 %v202
        %v247 = vunpack.c.l.bf16 %v204
        %v248 = vunpack.c.l.bf16 %v205
        %v249 = vunpack.c.l.bf16 %v207
        %v250 = vunpack.c.l.bf16 %v208
        %v251 = vunpack.c.l.bf16 %v210
        %v252 = vunpack.c.l.bf16 %v211
        %v253 = vunpack.c.l.bf16 %v213
        %v254 = vunpack.c.l.bf16 %v214
        %v255 = vunpack.c.l.bf16 %v216
        %v256 = vunpack.c.l.bf16 %v217
        %v257 = vunpack.c.l.bf16 %v173
        %v258 = vunpack.c.l.bf16 %v176
        %v259 = vunpack.c.l.bf16 %v179
        %v260 = vunpack.c.l.bf16 %v182
        %v261 = vunpack.c.l.bf16 %v185
        %v262 = vunpack.c.l.bf16 %v188
        %v263 = vunpack.c.l.bf16 %v191
        %v264 = vunpack.c.l.bf16 %v194
        %v265 = vunpack.c.l.bf16 %v197
        %v266 = vunpack.c.l.bf16 %v200
        %v267 = vunpack.c.l.bf16 %v203
        %v268 = vunpack.c.l.bf16 %v206
        %v269 = vunpack.c.l.bf16 %v209
        %v270 = vunpack.c.l.bf16 %v212
        %v271 = vunpack.c.l.bf16 %v215
        %v272 = vunpack.c.l.bf16 %v218
        %vm321 = vcmask 1046528
        %v322 = vrot.slane %v225, 1
        %v323 = vrot.slane %v226, 1
        %v324 = vsel %vm321, %v322, %v323
        %v325 = vrot.slane %v257, 1
        %v326 = vsel %vm321, %v323, %v325
        %v327 = vrot.slane %v227, 1
        %v328 = vrot.slane %v228, 1
        %v329 = vsel %vm321, %v327, %v328
        %v330 = vrot.slane %v258, 1
        %v331 = vsel %vm321, %v328, %v330
        %v332 = vrot.slane %v229, 1
        %v333 = vrot.slane %v230, 1
        %v334 = vsel %vm321, %v332, %v333
        %v335 = vrot.slane %v259, 1
        %v336 = vsel %vm321, %v333, %v335
        %v337 = vrot.slane %v231, 1
        %v338 = vrot.slane %v232, 1
        %v339 = vsel %vm321, %v337, %v338
        %v340 = vrot.slane %v260, 1
        %v341 = vsel %vm321, %v338, %v340
        %v342 = vrot.slane %v233, 1
        %v343 = vrot.slane %v234, 1
        %v344 = vsel %vm321, %v342, %v343
        %v345 = vrot.slane %v261, 1
        %v346 = vsel %vm321, %v343, %v345
        %v347 = vrot.slane %v235, 1
        %v348 = vrot.slane %v236, 1
        %v349 = vsel %vm321, %v347, %v348
        %v350 = vrot.slane %v262, 1
        %v351 = vsel %vm321, %v348, %v350
        %v352 = vrot.slane %v237, 1
        %v353 = vrot.slane %v238, 1
        %v354 = vsel %vm321, %v352, %v353
        %v355 = vrot.slane %v263, 1
        %v356 = vsel %vm321, %v353, %v355
        %v357 = vrot.slane %v239, 1
        %v358 = vrot.slane %v240, 1
        %v359 = vsel %vm321, %v357, %v358
        %v360 = vrot.slane %v264, 1
        %v361 = vsel %vm321, %v358, %v360
        %v362 = vrot.slane %v241, 1
        %v363 = vrot.slane %v242, 1
        %v364 = vsel %vm321, %v362, %v363
        %v365 = vrot.slane %v265, 1
        %v366 = vsel %vm321, %v363, %v365
        %v367 = vrot.slane %v243, 1
        %v368 = vrot.slane %v244, 1
        %v369 = vsel %vm321, %v367, %v368
        %v370 = vrot.slane %v266, 1
        %v371 = vsel %vm321, %v368, %v370
        %v372 = vrot.slane %v245, 1
        %v373 = vrot.slane %v246, 1
        %v374 = vsel %vm321, %v372, %v373
        %v375 = vrot.slane %v267, 1
        %v376 = vsel %vm321, %v373, %v375
        %v377 = vrot.slane %v247, 1
        %v378 = vrot.slane %v248, 1
        %v379 = vsel %vm321, %v377, %v378
        %v380 = vrot.slane %v268, 1
        %v381 = vsel %vm321, %v378, %v380
        %v382 = vrot.slane %v249, 1
        %v383 = vrot.slane %v250, 1
        %v384 = vsel %vm321, %v382, %v383
        %v385 = vrot.slane %v269, 1
        %v386 = vsel %vm321, %v383, %v385
        %v387 = vrot.slane %v251, 1
        %v388 = vrot.slane %v252, 1
        %v389 = vsel %vm321, %v387, %v388
        %v390 = vrot.slane %v270, 1
        %v391 = vsel %vm321, %v388, %v390
        %v392 = vrot.slane %v253, 1
        %v393 = vrot.slane %v254, 1
        %v394 = vsel %vm321, %v392, %v393
        %v395 = vrot.slane %v271, 1
        %v396 = vsel %vm321, %v393, %v395
        %v397 = vrot.slane %v255, 1
        %v398 = vrot.slane %v256, 1
        %v399 = vsel %vm321, %v397, %v398
        %v400 = vrot.slane %v272, 1
        %v401 = vsel %vm321, %v398, %v400
        %vm402 = vcmask 1045504
        %v403 = vrot.slane %v225, 2
        %v404 = vrot.slane %v226, 2
        %v405 = vsel %vm402, %v403, %v404
        %v406 = vrot.slane %v257, 2
        %v407 = vsel %vm402, %v404, %v406
        %v408 = vrot.slane %v227, 2
        %v409 = vrot.slane %v228, 2
        %v410 = vsel %vm402, %v408, %v409
        %v411 = vrot.slane %v258, 2
        %v412 = vsel %vm402, %v409, %v411
        %v413 = vrot.slane %v229, 2
        %v414 = vrot.slane %v230, 2
        %v415 = vsel %vm402, %v413, %v414
        %v416 = vrot.slane %v259, 2
        %v417 = vsel %vm402, %v414, %v416
        %v418 = vrot.slane %v231, 2
        %v419 = vrot.slane %v232, 2
        %v420 = vsel %vm402, %v418, %v419
        %v421 = vrot.slane %v260, 2
        %v422 = vsel %vm402, %v419, %v421
        %v423 = vrot.slane %v233, 2
        %v424 = vrot.slane %v234, 2
        %v425 = vsel %vm402, %v423, %v424
        %v426 = vrot.slane %v261, 2
        %v427 = vsel %vm402, %v424, %v426
        %v428 = vrot.slane %v235, 2
        %v429 = vrot.slane %v236, 2
        %v430 = vsel %vm402, %v428, %v429
        %v431 = vrot.slane %v262, 2
        %v432 = vsel %vm402, %v429, %v431
        %v433 = vrot.slane %v237, 2
        %v434 = vrot.slane %v238, 2
        %v435 = vsel %vm402, %v433, %v434
        %v436 = vrot.slane %v263, 2
        %v437 = vsel %vm402, %v434, %v436
        %v438 = vrot.slane %v239, 2
        %v439 = vrot.slane %v240, 2
        %v440 = vsel %vm402, %v438, %v439
        %v441 = vrot.slane %v264, 2
        %v442 = vsel %vm402, %v439, %v441
        %v443 = vrot.slane %v241, 2
        %v444 = vrot.slane %v242, 2
        %v445 = vsel %vm402, %v443, %v444
        %v446 = vrot.slane %v265, 2
        %v447 = vsel %vm402, %v444, %v446
        %v448 = vrot.slane %v243, 2
        %v449 = vrot.slane %v244, 2
        %v450 = vsel %vm402, %v448, %v449
        %v451 = vrot.slane %v266, 2
        %v452 = vsel %vm402, %v449, %v451
        %v453 = vrot.slane %v245, 2
        %v454 = vrot.slane %v246, 2
        %v455 = vsel %vm402, %v453, %v454
        %v456 = vrot.slane %v267, 2
        %v457 = vsel %vm402, %v454, %v456
        %v458 = vrot.slane %v247, 2
        %v459 = vrot.slane %v248, 2
        %v460 = vsel %vm402, %v458, %v459
        %v461 = vrot.slane %v268, 2
        %v462 = vsel %vm402, %v459, %v461
        %v463 = vrot.slane %v249, 2
        %v464 = vrot.slane %v250, 2
        %v465 = vsel %vm402, %v463, %v464
        %v466 = vrot.slane %v269, 2
        %v467 = vsel %vm402, %v464, %v466
        %v468 = vrot.slane %v251, 2
        %v469 = vrot.slane %v252, 2
        %v470 = vsel %vm402, %v468, %v469
        %v471 = vrot.slane %v270, 2
        %v472 = vsel %vm402, %v469, %v471
        %v473 = vrot.slane %v253, 2
        %v474 = vrot.slane %v254, 2
        %v475 = vsel %vm402, %v473, %v474
        %v476 = vrot.slane %v271, 2
        %v477 = vsel %vm402, %v474, %v476
        %v478 = vrot.slane %v255, 2
        %v479 = vrot.slane %v256, 2
        %v480 = vsel %vm402, %v478, %v479
        %v481 = vrot.slane %v272, 2
        %v482 = vsel %vm402, %v479, %v481
        %v483 = vunpack.c.l.bf16 %v219
        %v484 = vunpack.c.l.bf16 %v220
        %v485 = vunpack.c.l.bf16 %v221
        %v489 = vrot.slane %v483, 1
        %v490 = vrot.slane %v484, 1
        %v491 = vsel %vm321, %v489, %v490
        %v492 = vrot.slane %v485, 1
        %v493 = vsel %vm321, %v490, %v492
        %v494 = vrot.slane %v483, 2
        %v495 = vrot.slane %v484, 2
        %v496 = vsel %vm402, %v494, %v495
        %v497 = vrot.slane %v485, 2
        %v498 = vsel %vm402, %v495, %v497
        %v499 = vunpack.c.l.bf16 %v222
        %v500 = vunpack.c.l.bf16 %v223
        %v501 = vunpack.c.l.bf16 %v224
        %v505 = vrot.slane %v499, 1
        %v506 = vrot.slane %v500, 1
        %v507 = vsel %vm321, %v505, %v506
        %v508 = vrot.slane %v501, 1
        %v509 = vsel %vm321, %v506, %v508
        %v510 = vrot.slane %v499, 2
        %v511 = vrot.slane %v500, 2
        %v512 = vsel %vm402, %v510, %v511
        %v513 = vrot.slane %v501, 2
        %v514 = vsel %vm402, %v511, %v513
        %515 = vrot.lane.b32.xlu0 %v324, 4
        %v516 = vpop.permute.xlu0 %515
        %517 = vrot.lane.b32.xlu0 %v326, 4
        %v518 = vpop.permute.xlu0 %517
        %519 = vrot.lane.b32.xlu0 %v329, 4
        %v520 = vpop.permute.xlu0 %519
        %521 = vrot.lane.b32.xlu0 %v331, 4
        %v522 = vpop.permute.xlu0 %521
        %523 = vrot.lane.b32.xlu0 %v334, 4
        %v524 = vpop.permute.xlu0 %523
        %525 = vrot.lane.b32.xlu0 %v336, 4
        %v526 = vpop.permute.xlu0 %525
        %527 = vrot.lane.b32.xlu0 %v339, 4
        %v528 = vpop.permute.xlu0 %527
        %529 = vrot.lane.b32.xlu0 %v341, 4
        %v530 = vpop.permute.xlu0 %529
        %531 = vrot.lane.b32.xlu0 %v344, 4
        %v532 = vpop.permute.xlu0 %531
        %533 = vrot.lane.b32.xlu0 %v346, 4
        %v534 = vpop.permute.xlu0 %533
        %535 = vrot.lane.b32.xlu0 %v349, 4
        %v536 = vpop.permute.xlu0 %535
        %537 = vrot.lane.b32.xlu0 %v351, 4
        %v538 = vpop.permute.xlu0 %537
        %539 = vrot.lane.b32.xlu0 %v354, 4
        %v540 = vpop.permute.xlu0 %539
        %541 = vrot.lane.b32.xlu0 %v356, 4
        %v542 = vpop.permute.xlu0 %541
        %543 = vrot.lane.b32.xlu0 %v359, 4
        %v544 = vpop.permute.xlu0 %543
        %545 = vrot.lane.b32.xlu0 %v361, 4
        %v546 = vpop.permute.xlu0 %545
        %547 = vrot.lane.b32.xlu0 %v364, 4
        %v548 = vpop.permute.xlu0 %547
        %549 = vrot.lane.b32.xlu0 %v366, 4
        %v550 = vpop.permute.xlu0 %549
        %551 = vrot.lane.b32.xlu0 %v369, 4
        %v552 = vpop.permute.xlu0 %551
        %553 = vrot.lane.b32.xlu0 %v371, 4
        %v554 = vpop.permute.xlu0 %553
        %555 = vrot.lane.b32.xlu0 %v374, 4
        %v556 = vpop.permute.xlu0 %555
        %557 = vrot.lane.b32.xlu0 %v376, 4
        %v558 = vpop.permute.xlu0 %557
        %559 = vrot.lane.b32.xlu0 %v379, 4
        %v560 = vpop.permute.xlu0 %559
        %561 = vrot.lane.b32.xlu0 %v381, 4
        %v562 = vpop.permute.xlu0 %561
        %563 = vrot.lane.b32.xlu0 %v384, 4
        %v564 = vpop.permute.xlu0 %563
        %565 = vrot.lane.b32.xlu0 %v386, 4
        %v566 = vpop.permute.xlu0 %565
        %567 = vrot.lane.b32.xlu0 %v389, 4
        %v568 = vpop.permute.xlu0 %567
        %569 = vrot.lane.b32.xlu0 %v391, 4
        %v570 = vpop.permute.xlu0 %569
        %571 = vrot.lane.b32.xlu0 %v394, 4
        %v572 = vpop.permute.xlu0 %571
        %573 = vrot.lane.b32.xlu0 %v396, 4
        %v574 = vpop.permute.xlu0 %573
        %575 = vrot.lane.b32.xlu0 %v399, 4
        %v576 = vpop.permute.xlu0 %575
        %577 = vrot.lane.b32.xlu0 %v401, 4
        %v578 = vpop.permute.xlu0 %577
        %611 = vrot.lane.b32.xlu0 %v405, 8
        %v612 = vpop.permute.xlu0 %611
        %613 = vrot.lane.b32.xlu0 %v407, 8
        %v614 = vpop.permute.xlu0 %613
        %615 = vrot.lane.b32.xlu0 %v410, 8
        %v616 = vpop.permute.xlu0 %615
        %617 = vrot.lane.b32.xlu0 %v412, 8
        %v618 = vpop.permute.xlu0 %617
        %619 = vrot.lane.b32.xlu0 %v415, 8
        %v620 = vpop.permute.xlu0 %619
        %621 = vrot.lane.b32.xlu0 %v417, 8
        %v622 = vpop.permute.xlu0 %621
        %623 = vrot.lane.b32.xlu0 %v420, 8
        %v624 = vpop.permute.xlu0 %623
        %625 = vrot.lane.b32.xlu0 %v422, 8
        %v626 = vpop.permute.xlu0 %625
        %627 = vrot.lane.b32.xlu0 %v425, 8
        %v628 = vpop.permute.xlu0 %627
        %629 = vrot.lane.b32.xlu0 %v427, 8
        %v630 = vpop.permute.xlu0 %629
        %631 = vrot.lane.b32.xlu0 %v430, 8
        %v632 = vpop.permute.xlu0 %631
        %633 = vrot.lane.b32.xlu0 %v432, 8
        %v634 = vpop.permute.xlu0 %633
        %635 = vrot.lane.b32.xlu0 %v435, 8
        %v636 = vpop.permute.xlu0 %635
        %637 = vrot.lane.b32.xlu0 %v437, 8
        %v638 = vpop.permute.xlu0 %637
        %639 = vrot.lane.b32.xlu0 %v440, 8
        %v640 = vpop.permute.xlu0 %639
        %641 = vrot.lane.b32.xlu0 %v442, 8
        %v642 = vpop.permute.xlu0 %641
        %643 = vrot.lane.b32.xlu0 %v445, 8
        %v644 = vpop.permute.xlu0 %643
        %645 = vrot.lane.b32.xlu0 %v447, 8
        %v646 = vpop.permute.xlu0 %645
        %647 = vrot.lane.b32.xlu0 %v450, 8
        %v648 = vpop.permute.xlu0 %647
        %649 = vrot.lane.b32.xlu0 %v452, 8
        %v650 = vpop.permute.xlu0 %649
        %651 = vrot.lane.b32.xlu0 %v455, 8
        %v652 = vpop.permute.xlu0 %651
        %653 = vrot.lane.b32.xlu0 %v457, 8
        %v654 = vpop.permute.xlu0 %653
        %655 = vrot.lane.b32.xlu0 %v460, 8
        %v656 = vpop.permute.xlu0 %655
        %657 = vrot.lane.b32.xlu0 %v462, 8
        %v658 = vpop.permute.xlu0 %657
        %659 = vrot.lane.b32.xlu0 %v465, 8
        %v660 = vpop.permute.xlu0 %659
        %661 = vrot.lane.b32.xlu0 %v467, 8
        %v662 = vpop.permute.xlu0 %661
        %663 = vrot.lane.b32.xlu0 %v470, 8
        %v664 = vpop.permute.xlu0 %663
        %665 = vrot.lane.b32.xlu0 %v472, 8
        %v666 = vpop.permute.xlu0 %665
        %667 = vrot.lane.b32.xlu0 %v475, 8
        %v668 = vpop.permute.xlu0 %667
        %669 = vrot.lane.b32.xlu0 %v477, 8
        %v670 = vpop.permute.xlu0 %669
        %671 = vrot.lane.b32.xlu0 %v480, 8
        %v672 = vpop.permute.xlu0 %671
        %673 = vrot.lane.b32.xlu0 %v482, 8
        %v674 = vpop.permute.xlu0 %673
        %707 = vrot.lane.b32.xlu0 %v227, 12
        %v708 = vpop.permute.xlu0 %707
        %709 = vrot.lane.b32.xlu0 %v228, 12
        %v710 = vpop.permute.xlu0 %709
        %711 = vrot.lane.b32.xlu0 %v229, 12
        %v712 = vpop.permute.xlu0 %711
        %713 = vrot.lane.b32.xlu0 %v230, 12
        %v714 = vpop.permute.xlu0 %713
        %715 = vrot.lane.b32.xlu0 %v231, 12
        %v716 = vpop.permute.xlu0 %715
        %717 = vrot.lane.b32.xlu0 %v232, 12
        %v718 = vpop.permute.xlu0 %717
        %719 = vrot.lane.b32.xlu0 %v233, 12
        %v720 = vpop.permute.xlu0 %719
        %721 = vrot.lane.b32.xlu0 %v234, 12
        %v722 = vpop.permute.xlu0 %721
        %723 = vrot.lane.b32.xlu0 %v235, 12
        %v724 = vpop.permute.xlu0 %723
        %725 = vrot.lane.b32.xlu0 %v236, 12
        %v726 = vpop.permute.xlu0 %725
        %727 = vrot.lane.b32.xlu0 %v237, 12
        %v728 = vpop.permute.xlu0 %727
        %729 = vrot.lane.b32.xlu0 %v238, 12
        %v730 = vpop.permute.xlu0 %729
        %731 = vrot.lane.b32.xlu0 %v239, 12
        %v732 = vpop.permute.xlu0 %731
        %733 = vrot.lane.b32.xlu0 %v240, 12
        %v734 = vpop.permute.xlu0 %733
        %735 = vrot.lane.b32.xlu0 %v241, 12
        %v736 = vpop.permute.xlu0 %735
        %737 = vrot.lane.b32.xlu0 %v242, 12
        %v738 = vpop.permute.xlu0 %737
        %739 = vrot.lane.b32.xlu0 %v243, 12
        %v740 = vpop.permute.xlu0 %739
        %741 = vrot.lane.b32.xlu0 %v244, 12
        %v742 = vpop.permute.xlu0 %741
        %743 = vrot.lane.b32.xlu0 %v245, 12
        %v744 = vpop.permute.xlu0 %743
        %745 = vrot.lane.b32.xlu0 %v246, 12
        %v746 = vpop.permute.xlu0 %745
        %747 = vrot.lane.b32.xlu0 %v247, 12
        %v748 = vpop.permute.xlu0 %747
        %749 = vrot.lane.b32.xlu0 %v248, 12
        %v750 = vpop.permute.xlu0 %749
        %751 = vrot.lane.b32.xlu0 %v249, 12
        %v752 = vpop.permute.xlu0 %751
        %753 = vrot.lane.b32.xlu0 %v250, 12
        %v754 = vpop.permute.xlu0 %753
        %755 = vrot.lane.b32.xlu0 %v251, 12
        %v756 = vpop.permute.xlu0 %755
        %757 = vrot.lane.b32.xlu0 %v252, 12
        %v758 = vpop.permute.xlu0 %757
        %759 = vrot.lane.b32.xlu0 %v253, 12
        %v760 = vpop.permute.xlu0 %759
        %761 = vrot.lane.b32.xlu0 %v254, 12
        %v762 = vpop.permute.xlu0 %761
        %763 = vrot.lane.b32.xlu0 %v255, 12
        %v764 = vpop.permute.xlu0 %763
        %765 = vrot.lane.b32.xlu0 %v256, 12
        %v766 = vpop.permute.xlu0 %765
        %767 = vrot.lane.b32.xlu0 %v483, 12
        %v768 = vpop.permute.xlu0 %767
        %769 = vrot.lane.b32.xlu0 %v484, 12
        %v770 = vpop.permute.xlu0 %769
        %803 = vrot.lane.b32.xlu0 %v329, 16
        %v804 = vpop.permute.xlu0 %803
        %805 = vrot.lane.b32.xlu0 %v331, 16
        %v806 = vpop.permute.xlu0 %805
        %807 = vrot.lane.b32.xlu0 %v334, 16
        %v808 = vpop.permute.xlu0 %807
        %809 = vrot.lane.b32.xlu0 %v336, 16
        %v810 = vpop.permute.xlu0 %809
        %811 = vrot.lane.b32.xlu0 %v339, 16
        %v812 = vpop.permute.xlu0 %811
        %813 = vrot.lane.b32.xlu0 %v341, 16
        %v814 = vpop.permute.xlu0 %813
        %815 = vrot.lane.b32.xlu0 %v344, 16
        %v816 = vpop.permute.xlu0 %815
        %817 = vrot.lane.b32.xlu0 %v346, 16
        %v818 = vpop.permute.xlu0 %817
        %819 = vrot.lane.b32.xlu0 %v349, 16
        %v820 = vpop.permute.xlu0 %819
        %821 = vrot.lane.b32.xlu0 %v351, 16
        %v822 = vpop.permute.xlu0 %821
        %823 = vrot.lane.b32.xlu0 %v354, 16
        %v824 = vpop.permute.xlu0 %823
        %825 = vrot.lane.b32.xlu0 %v356, 16
        %v826 = vpop.permute.xlu0 %825
        %827 = vrot.lane.b32.xlu0 %v359, 16
        %v828 = vpop.permute.xlu0 %827
        %829 = vrot.lane.b32.xlu0 %v361, 16
        %v830 = vpop.permute.xlu0 %829
        %831 = vrot.lane.b32.xlu0 %v364, 16
        %v832 = vpop.permute.xlu0 %831
        %833 = vrot.lane.b32.xlu0 %v366, 16
        %v834 = vpop.permute.xlu0 %833
        %835 = vrot.lane.b32.xlu0 %v369, 16
        %v836 = vpop.permute.xlu0 %835
        %837 = vrot.lane.b32.xlu0 %v371, 16
        %v838 = vpop.permute.xlu0 %837
        %839 = vrot.lane.b32.xlu0 %v374, 16
        %v840 = vpop.permute.xlu0 %839
        %841 = vrot.lane.b32.xlu0 %v376, 16
        %v842 = vpop.permute.xlu0 %841
        %843 = vrot.lane.b32.xlu0 %v379, 16
        %v844 = vpop.permute.xlu0 %843
        %845 = vrot.lane.b32.xlu0 %v381, 16
        %v846 = vpop.permute.xlu0 %845
        %847 = vrot.lane.b32.xlu0 %v384, 16
        %v848 = vpop.permute.xlu0 %847
        %849 = vrot.lane.b32.xlu0 %v386, 16
        %v850 = vpop.permute.xlu0 %849
        %851 = vrot.lane.b32.xlu0 %v389, 16
        %v852 = vpop.permute.xlu0 %851
        %853 = vrot.lane.b32.xlu0 %v391, 16
        %v854 = vpop.permute.xlu0 %853
        %855 = vrot.lane.b32.xlu0 %v394, 16
        %v856 = vpop.permute.xlu0 %855
        %857 = vrot.lane.b32.xlu0 %v396, 16
        %v858 = vpop.permute.xlu0 %857
        %859 = vrot.lane.b32.xlu0 %v399, 16
        %v860 = vpop.permute.xlu0 %859
        %861 = vrot.lane.b32.xlu0 %v401, 16
        %v862 = vpop.permute.xlu0 %861
        %863 = vrot.lane.b32.xlu0 %v491, 16
        %v864 = vpop.permute.xlu0 %863
        %865 = vrot.lane.b32.xlu0 %v493, 16
        %v866 = vpop.permute.xlu0 %865
        %899 = vrot.lane.b32.xlu0 %v410, 20
        %v900 = vpop.permute.xlu0 %899
        %901 = vrot.lane.b32.xlu0 %v412, 20
        %v902 = vpop.permute.xlu0 %901
        %903 = vrot.lane.b32.xlu0 %v415, 20
        %v904 = vpop.permute.xlu0 %903
        %905 = vrot.lane.b32.xlu0 %v417, 20
        %v906 = vpop.permute.xlu0 %905
        %907 = vrot.lane.b32.xlu0 %v420, 20
        %v908 = vpop.permute.xlu0 %907
        %909 = vrot.lane.b32.xlu0 %v422, 20
        %v910 = vpop.permute.xlu0 %909
        %911 = vrot.lane.b32.xlu0 %v425, 20
        %v912 = vpop.permute.xlu0 %911
        %913 = vrot.lane.b32.xlu0 %v427, 20
        %v914 = vpop.permute.xlu0 %913
        %915 = vrot.lane.b32.xlu0 %v430, 20
        %v916 = vpop.permute.xlu0 %915
        %917 = vrot.lane.b32.xlu0 %v432, 20
        %v918 = vpop.permute.xlu0 %917
        %919 = vrot.lane.b32.xlu0 %v435, 20
        %v920 = vpop.permute.xlu0 %919
        %921 = vrot.lane.b32.xlu0 %v437, 20
        %v922 = vpop.permute.xlu0 %921
        %923 = vrot.lane.b32.xlu0 %v440, 20
        %v924 = vpop.permute.xlu0 %923
        %925 = vrot.lane.b32.xlu0 %v442, 20
        %v926 = vpop.permute.xlu0 %925
        %927 = vrot.lane.b32.xlu0 %v445, 20
        %v928 = vpop.permute.xlu0 %927
        %929 = vrot.lane.b32.xlu0 %v447, 20
        %v930 = vpop.permute.xlu0 %929
        %931 = vrot.lane.b32.xlu0 %v450, 20
        %v932 = vpop.permute.xlu0 %931
        %933 = vrot.lane.b32.xlu0 %v452, 20
        %v934 = vpop.permute.xlu0 %933
        %935 = vrot.lane.b32.xlu0 %v455, 20
        %v936 = vpop.permute.xlu0 %935
        %937 = vrot.lane.b32.xlu0 %v457, 20
        %v938 = vpop.permute.xlu0 %937
        %939 = vrot.lane.b32.xlu0 %v460, 20
        %v940 = vpop.permute.xlu0 %939
        %941 = vrot.lane.b32.xlu0 %v462, 20
        %v942 = vpop.permute.xlu0 %941
        %943 = vrot.lane.b32.xlu0 %v465, 20
        %v944 = vpop.permute.xlu0 %943
        %945 = vrot.lane.b32.xlu0 %v467, 20
        %v946 = vpop.permute.xlu0 %945
        %947 = vrot.lane.b32.xlu0 %v470, 20
        %v948 = vpop.permute.xlu0 %947
        %949 = vrot.lane.b32.xlu0 %v472, 20
        %v950 = vpop.permute.xlu0 %949
        %951 = vrot.lane.b32.xlu0 %v475, 20
        %v952 = vpop.permute.xlu0 %951
        %953 = vrot.lane.b32.xlu0 %v477, 20
        %v954 = vpop.permute.xlu0 %953
        %955 = vrot.lane.b32.xlu0 %v480, 20
        %v956 = vpop.permute.xlu0 %955
        %957 = vrot.lane.b32.xlu0 %v482, 20
        %v958 = vpop.permute.xlu0 %957
        %959 = vrot.lane.b32.xlu0 %v496, 20
        %v960 = vpop.permute.xlu0 %959
        %961 = vrot.lane.b32.xlu0 %v498, 20
        %v962 = vpop.permute.xlu0 %961
        %995 = vrot.lane.b32.xlu0 %v229, 24
        %v996 = vpop.permute.xlu0 %995
        %997 = vrot.lane.b32.xlu0 %v230, 24
        %v998 = vpop.permute.xlu0 %997
        %999 = vrot.lane.b32.xlu0 %v231, 24
        %v1000 = vpop.permute.xlu0 %999
        %1001 = vrot.lane.b32.xlu0 %v232, 24
        %v1002 = vpop.permute.xlu0 %1001
        %1003 = vrot.lane.b32.xlu0 %v233, 24
        %v1004 = vpop.permute.xlu0 %1003
        %1005 = vrot.lane.b32.xlu0 %v234, 24
        %v1006 = vpop.permute.xlu0 %1005
        %1007 = vrot.lane.b32.xlu0 %v235, 24
        %v1008 = vpop.permute.xlu0 %1007
        %1009 = vrot.lane.b32.xlu0 %v236, 24
        %v1010 = vpop.permute.xlu0 %1009
        %1011 = vrot.lane.b32.xlu0 %v237, 24
        %v1012 = vpop.permute.xlu0 %1011
        %1013 = vrot.lane.b32.xlu0 %v238, 24
        %v1014 = vpop.permute.xlu0 %1013
        %1015 = vrot.lane.b32.xlu0 %v239, 24
        %v1016 = vpop.permute.xlu0 %1015
        %1017 = vrot.lane.b32.xlu0 %v240, 24
        %v1018 = vpop.permute.xlu0 %1017
        %1019 = vrot.lane.b32.xlu0 %v241, 24
        %v1020 = vpop.permute.xlu0 %1019
        %1021 = vrot.lane.b32.xlu0 %v242, 24
        %v1022 = vpop.permute.xlu0 %1021
        %1023 = vrot.lane.b32.xlu0 %v243, 24
        %v1024 = vpop.permute.xlu0 %1023
        %1025 = vrot.lane.b32.xlu0 %v244, 24
        %v1026 = vpop.permute.xlu0 %1025
        %1027 = vrot.lane.b32.xlu0 %v245, 24
        %v1028 = vpop.permute.xlu0 %1027
        %1029 = vrot.lane.b32.xlu0 %v246, 24
        %v1030 = vpop.permute.xlu0 %1029
        %1031 = vrot.lane.b32.xlu0 %v247, 24
        %v1032 = vpop.permute.xlu0 %1031
        %1033 = vrot.lane.b32.xlu0 %v248, 24
        %v1034 = vpop.permute.xlu0 %1033
        %1035 = vrot.lane.b32.xlu0 %v249, 24
        %v1036 = vpop.permute.xlu0 %1035
        %1037 = vrot.lane.b32.xlu0 %v250, 24
        %v1038 = vpop.permute.xlu0 %1037
        %1039 = vrot.lane.b32.xlu0 %v251, 24
        %v1040 = vpop.permute.xlu0 %1039
        %1041 = vrot.lane.b32.xlu0 %v252, 24
        %v1042 = vpop.permute.xlu0 %1041
        %1043 = vrot.lane.b32.xlu0 %v253, 24
        %v1044 = vpop.permute.xlu0 %1043
        %1045 = vrot.lane.b32.xlu0 %v254, 24
        %v1046 = vpop.permute.xlu0 %1045
        %1047 = vrot.lane.b32.xlu0 %v255, 24
        %v1048 = vpop.permute.xlu0 %1047
        %1049 = vrot.lane.b32.xlu0 %v256, 24
        %v1050 = vpop.permute.xlu0 %1049
        %1051 = vrot.lane.b32.xlu0 %v483, 24
        %v1052 = vpop.permute.xlu0 %1051
        %1053 = vrot.lane.b32.xlu0 %v484, 24
        %v1054 = vpop.permute.xlu0 %1053
        %1055 = vrot.lane.b32.xlu0 %v499, 24
        %v1056 = vpop.permute.xlu0 %1055
        %1057 = vrot.lane.b32.xlu0 %v500, 24
        %v1058 = vpop.permute.xlu0 %1057
        %1091 = vrot.lane.b32.xlu0 %v334, 28
        %v1092 = vpop.permute.xlu0 %1091
        %1093 = vrot.lane.b32.xlu0 %v336, 28
        %v1094 = vpop.permute.xlu0 %1093
        %1095 = vrot.lane.b32.xlu0 %v339, 28
        %v1096 = vpop.permute.xlu0 %1095
        %1097 = vrot.lane.b32.xlu0 %v341, 28
        %v1098 = vpop.permute.xlu0 %1097
        %1099 = vrot.lane.b32.xlu0 %v344, 28
        %v1100 = vpop.permute.xlu0 %1099
        %1101 = vrot.lane.b32.xlu0 %v346, 28
        %v1102 = vpop.permute.xlu0 %1101
        %1103 = vrot.lane.b32.xlu0 %v349, 28
        %v1104 = vpop.permute.xlu0 %1103
        %1105 = vrot.lane.b32.xlu0 %v351, 28
        %v1106 = vpop.permute.xlu0 %1105
        %1107 = vrot.lane.b32.xlu0 %v354, 28
        %v1108 = vpop.permute.xlu0 %1107
        %1109 = vrot.lane.b32.xlu0 %v356, 28
        %v1110 = vpop.permute.xlu0 %1109
        %1111 = vrot.lane.b32.xlu0 %v359, 28
        %v1112 = vpop.permute.xlu0 %1111
        %1113 = vrot.lane.b32.xlu0 %v361, 28
        %v1114 = vpop.permute.xlu0 %1113
        %1115 = vrot.lane.b32.xlu0 %v364, 28
        %v1116 = vpop.permute.xlu0 %1115
        %1117 = vrot.lane.b32.xlu0 %v366, 28
        %v1118 = vpop.permute.xlu0 %1117
        %1119 = vrot.lane.b32.xlu0 %v369, 28
        %v1120 = vpop.permute.xlu0 %1119
        %1121 = vrot.lane.b32.xlu0 %v371, 28
        %v1122 = vpop.permute.xlu0 %1121
        %1123 = vrot.lane.b32.xlu0 %v374, 28
        %v1124 = vpop.permute.xlu0 %1123
        %1125 = vrot.lane.b32.xlu0 %v376, 28
        %v1126 = vpop.permute.xlu0 %1125
        %1127 = vrot.lane.b32.xlu0 %v379, 28
        %v1128 = vpop.permute.xlu0 %1127
        %1129 = vrot.lane.b32.xlu0 %v381, 28
        %v1130 = vpop.permute.xlu0 %1129
        %1131 = vrot.lane.b32.xlu0 %v384, 28
        %v1132 = vpop.permute.xlu0 %1131
        %1133 = vrot.lane.b32.xlu0 %v386, 28
        %v1134 = vpop.permute.xlu0 %1133
        %1135 = vrot.lane.b32.xlu0 %v389, 28
        %v1136 = vpop.permute.xlu0 %1135
        %1137 = vrot.lane.b32.xlu0 %v391, 28
        %v1138 = vpop.permute.xlu0 %1137
        %1139 = vrot.lane.b32.xlu0 %v394, 28
        %v1140 = vpop.permute.xlu0 %1139
        %1141 = vrot.lane.b32.xlu0 %v396, 28
        %v1142 = vpop.permute.xlu0 %1141
        %1143 = vrot.lane.b32.xlu0 %v399, 28
        %v1144 = vpop.permute.xlu0 %1143
        %1145 = vrot.lane.b32.xlu0 %v401, 28
        %v1146 = vpop.permute.xlu0 %1145
        %1147 = vrot.lane.b32.xlu0 %v491, 28
        %v1148 = vpop.permute.xlu0 %1147
        %1149 = vrot.lane.b32.xlu0 %v493, 28
        %v1150 = vpop.permute.xlu0 %1149
        %1151 = vrot.lane.b32.xlu0 %v507, 28
        %v1152 = vpop.permute.xlu0 %1151
        %1153 = vrot.lane.b32.xlu0 %v509, 28
        %v1154 = vpop.permute.xlu0 %1153
        %1187 = vrot.lane.b32.xlu0 %v415, 32
        %v1188 = vpop.permute.xlu0 %1187
        %1189 = vrot.lane.b32.xlu0 %v417, 32
        %v1190 = vpop.permute.xlu0 %1189
        %1191 = vrot.lane.b32.xlu0 %v420, 32
        %v1192 = vpop.permute.xlu0 %1191
        %1193 = vrot.lane.b32.xlu0 %v422, 32
        %v1194 = vpop.permute.xlu0 %1193
        %1195 = vrot.lane.b32.xlu0 %v425, 32
        %v1196 = vpop.permute.xlu0 %1195
        %1197 = vrot.lane.b32.xlu0 %v427, 32
        %v1198 = vpop.permute.xlu0 %1197
        %1199 = vrot.lane.b32.xlu0 %v430, 32
        %v1200 = vpop.permute.xlu0 %1199
        %1201 = vrot.lane.b32.xlu0 %v432, 32
        %v1202 = vpop.permute.xlu0 %1201
        %1203 = vrot.lane.b32.xlu0 %v435, 32
        %v1204 = vpop.permute.xlu0 %1203
        %1205 = vrot.lane.b32.xlu0 %v437, 32
        %v1206 = vpop.permute.xlu0 %1205
        %1207 = vrot.lane.b32.xlu0 %v440, 32
        %v1208 = vpop.permute.xlu0 %1207
        %1209 = vrot.lane.b32.xlu0 %v442, 32
        %v1210 = vpop.permute.xlu0 %1209
        %1211 = vrot.lane.b32.xlu0 %v445, 32
        %v1212 = vpop.permute.xlu0 %1211
        %1213 = vrot.lane.b32.xlu0 %v447, 32
        %v1214 = vpop.permute.xlu0 %1213
        %1215 = vrot.lane.b32.xlu0 %v450, 32
        %v1216 = vpop.permute.xlu0 %1215
        %1217 = vrot.lane.b32.xlu0 %v452, 32
        %v1218 = vpop.permute.xlu0 %1217
        %1219 = vrot.lane.b32.xlu0 %v455, 32
        %v1220 = vpop.permute.xlu0 %1219
        %1221 = vrot.lane.b32.xlu0 %v457, 32
        %v1222 = vpop.permute.xlu0 %1221
        %1223 = vrot.lane.b32.xlu0 %v460, 32
        %v1224 = vpop.permute.xlu0 %1223
        %1225 = vrot.lane.b32.xlu0 %v462, 32
        %v1226 = vpop.permute.xlu0 %1225
        %1227 = vrot.lane.b32.xlu0 %v465, 32
        %v1228 = vpop.permute.xlu0 %1227
        %1229 = vrot.lane.b32.xlu0 %v467, 32
        %v1230 = vpop.permute.xlu0 %1229
        %1231 = vrot.lane.b32.xlu0 %v470, 32
        %v1232 = vpop.permute.xlu0 %1231
        %1233 = vrot.lane.b32.xlu0 %v472, 32
        %v1234 = vpop.permute.xlu0 %1233
        %1235 = vrot.lane.b32.xlu0 %v475, 32
        %v1236 = vpop.permute.xlu0 %1235
        %1237 = vrot.lane.b32.xlu0 %v477, 32
        %v1238 = vpop.permute.xlu0 %1237
        %1239 = vrot.lane.b32.xlu0 %v480, 32
        %v1240 = vpop.permute.xlu0 %1239
        %1241 = vrot.lane.b32.xlu0 %v482, 32
        %v1242 = vpop.permute.xlu0 %1241
        %1243 = vrot.lane.b32.xlu0 %v496, 32
        %v1244 = vpop.permute.xlu0 %1243
        %1245 = vrot.lane.b32.xlu0 %v498, 32
        %v1246 = vpop.permute.xlu0 %1245
        %1247 = vrot.lane.b32.xlu0 %v512, 32
        %v1248 = vpop.permute.xlu0 %1247
        %1249 = vrot.lane.b32.xlu0 %v514, 32
        %v1250 = vpop.permute.xlu0 %1249
        %vm1283 = vcmask 31744
        %v1284 = vsel %vm1283, %v225, %v516
        %v1285 = vsel %vm1283, %v226, %v518
        %v1286 = vsel %vm1283, %v227, %v520
        %v1287 = vsel %vm1283, %v228, %v522
        %v1288 = vsel %vm1283, %v229, %v524
        %v1289 = vsel %vm1283, %v230, %v526
        %v1290 = vsel %vm1283, %v231, %v528
        %v1291 = vsel %vm1283, %v232, %v530
        %v1292 = vsel %vm1283, %v233, %v532
        %v1293 = vsel %vm1283, %v234, %v534
        %v1294 = vsel %vm1283, %v235, %v536
        %v1295 = vsel %vm1283, %v236, %v538
        %v1296 = vsel %vm1283, %v237, %v540
        %v1297 = vsel %vm1283, %v238, %v542
        %v1298 = vsel %vm1283, %v239, %v544
        %v1299 = vsel %vm1283, %v240, %v546
        %v1300 = vsel %vm1283, %v241, %v548
        %v1301 = vsel %vm1283, %v242, %v550
        %v1302 = vsel %vm1283, %v243, %v552
        %v1303 = vsel %vm1283, %v244, %v554
        %v1304 = vsel %vm1283, %v245, %v556
        %v1305 = vsel %vm1283, %v246, %v558
        %v1306 = vsel %vm1283, %v247, %v560
        %v1307 = vsel %vm1283, %v248, %v562
        %v1308 = vsel %vm1283, %v249, %v564
        %v1309 = vsel %vm1283, %v250, %v566
        %v1310 = vsel %vm1283, %v251, %v568
        %v1311 = vsel %vm1283, %v252, %v570
        %v1312 = vsel %vm1283, %v253, %v572
        %v1313 = vsel %vm1283, %v254, %v574
        %v1314 = vsel %vm1283, %v255, %v576
        %v1315 = vsel %vm1283, %v256, %v578
        %vm1316 = vcmask 64512
        %v1317 = vsel %vm1316, %v1284, %v612
        %v1318 = vsel %vm1316, %v1285, %v614
        %v1319 = vsel %vm1316, %v1286, %v616
        %v1320 = vsel %vm1316, %v1287, %v618
        %v1321 = vsel %vm1316, %v1288, %v620
        %v1322 = vsel %vm1316, %v1289, %v622
        %v1323 = vsel %vm1316, %v1290, %v624
        %v1324 = vsel %vm1316, %v1291, %v626
        %v1325 = vsel %vm1316, %v1292, %v628
        %v1326 = vsel %vm1316, %v1293, %v630
        %v1327 = vsel %vm1316, %v1294, %v632
        %v1328 = vsel %vm1316, %v1295, %v634
        %v1329 = vsel %vm1316, %v1296, %v636
        %v1330 = vsel %vm1316, %v1297, %v638
        %v1331 = vsel %vm1316, %v1298, %v640
        %v1332 = vsel %vm1316, %v1299, %v642
        %v1333 = vsel %vm1316, %v1300, %v644
        %v1334 = vsel %vm1316, %v1301, %v646
        %v1335 = vsel %vm1316, %v1302, %v648
        %v1336 = vsel %vm1316, %v1303, %v650
        %v1337 = vsel %vm1316, %v1304, %v652
        %v1338 = vsel %vm1316, %v1305, %v654
        %v1339 = vsel %vm1316, %v1306, %v656
        %v1340 = vsel %vm1316, %v1307, %v658
        %v1341 = vsel %vm1316, %v1308, %v660
        %v1342 = vsel %vm1316, %v1309, %v662
        %v1343 = vsel %vm1316, %v1310, %v664
        %v1344 = vsel %vm1316, %v1311, %v666
        %v1345 = vsel %vm1316, %v1312, %v668
        %v1346 = vsel %vm1316, %v1313, %v670
        %v1347 = vsel %vm1316, %v1314, %v672
        %v1348 = vsel %vm1316, %v1315, %v674
        %vm1349 = vcmask 97280
        %v1350 = vsel %vm1349, %v1317, %v708
        %v1351 = vsel %vm1349, %v1318, %v710
        %v1352 = vsel %vm1349, %v1319, %v712
        %v1353 = vsel %vm1349, %v1320, %v714
        %v1354 = vsel %vm1349, %v1321, %v716
        %v1355 = vsel %vm1349, %v1322, %v718
        %v1356 = vsel %vm1349, %v1323, %v720
        %v1357 = vsel %vm1349, %v1324, %v722
        %v1358 = vsel %vm1349, %v1325, %v724
        %v1359 = vsel %vm1349, %v1326, %v726
        %v1360 = vsel %vm1349, %v1327, %v728
        %v1361 = vsel %vm1349, %v1328, %v730
        %v1362 = vsel %vm1349, %v1329, %v732
        %v1363 = vsel %vm1349, %v1330, %v734
        %v1364 = vsel %vm1349, %v1331, %v736
        %v1365 = vsel %vm1349, %v1332, %v738
        %v1366 = vsel %vm1349, %v1333, %v740
        %v1367 = vsel %vm1349, %v1334, %v742
        %v1368 = vsel %vm1349, %v1335, %v744
        %v1369 = vsel %vm1349, %v1336, %v746
        %v1370 = vsel %vm1349, %v1337, %v748
        %v1371 = vsel %vm1349, %v1338, %v750
        %v1372 = vsel %vm1349, %v1339, %v752
        %v1373 = vsel %vm1349, %v1340, %v754
        %v1374 = vsel %vm1349, %v1341, %v756
        %v1375 = vsel %vm1349, %v1342, %v758
        %v1376 = vsel %vm1349, %v1343, %v760
        %v1377 = vsel %vm1349, %v1344, %v762
        %v1378 = vsel %vm1349, %v1345, %v764
        %v1379 = vsel %vm1349, %v1346, %v766
        %v1380 = vsel %vm1349, %v1347, %v768
        %v1381 = vsel %vm1349, %v1348, %v770
        %vm1382 = vcmask 130048
        %v1383 = vsel %vm1382, %v1350, %v804
        %v1384 = vsel %vm1382, %v1351, %v806
        %v1385 = vsel %vm1382, %v1352, %v808
        %v1386 = vsel %vm1382, %v1353, %v810
        %v1387 = vsel %vm1382, %v1354, %v812
        %v1388 = vsel %vm1382, %v1355, %v814
        %v1389 = vsel %vm1382, %v1356, %v816
        %v1390 = vsel %vm1382, %v1357, %v818
        %v1391 = vsel %vm1382, %v1358, %v820
        %v1392 = vsel %vm1382, %v1359, %v822
        %v1393 = vsel %vm1382, %v1360, %v824
        %v1394 = vsel %vm1382, %v1361, %v826
        %v1395 = vsel %vm1382, %v1362, %v828
        %v1396 = vsel %vm1382, %v1363, %v830
        %v1397 = vsel %vm1382, %v1364, %v832
        %v1398 = vsel %vm1382, %v1365, %v834
        %v1399 = vsel %vm1382, %v1366, %v836
        %v1400 = vsel %vm1382, %v1367, %v838
        %v1401 = vsel %vm1382, %v1368, %v840
        %v1402 = vsel %vm1382, %v1369, %v842
        %v1403 = vsel %vm1382, %v1370, %v844
        %v1404 = vsel %vm1382, %v1371, %v846
        %v1405 = vsel %vm1382, %v1372, %v848
        %v1406 = vsel %vm1382, %v1373, %v850
        %v1407 = vsel %vm1382, %v1374, %v852
        %v1408 = vsel %vm1382, %v1375, %v854
        %v1409 = vsel %vm1382, %v1376, %v856
        %v1410 = vsel %vm1382, %v1377, %v858
        %v1411 = vsel %vm1382, %v1378, %v860
        %v1412 = vsel %vm1382, %v1379, %v862
        %v1413 = vsel %vm1382, %v1380, %v864
        %v1414 = vsel %vm1382, %v1381, %v866
        %vm1415 = vcmask 162816
        %v1416 = vsel %vm1415, %v1383, %v900
        %v1417 = vsel %vm1415, %v1384, %v902
        %v1418 = vsel %vm1415, %v1385, %v904
        %v1419 = vsel %vm1415, %v1386, %v906
        %v1420 = vsel %vm1415, %v1387, %v908
        %v1421 = vsel %vm1415, %v1388, %v910
        %v1422 = vsel %vm1415, %v1389, %v912
        %v1423 = vsel %vm1415, %v1390, %v914
        %v1424 = vsel %vm1415, %v1391, %v916
        %v1425 = vsel %vm1415, %v1392, %v918
        %v1426 = vsel %vm1415, %v1393, %v920
        %v1427 = vsel %vm1415, %v1394, %v922
        %v1428 = vsel %vm1415, %v1395, %v924
        %v1429 = vsel %vm1415, %v1396, %v926
        %v1430 = vsel %vm1415, %v1397, %v928
        %v1431 = vsel %vm1415, %v1398, %v930
        %v1432 = vsel %vm1415, %v1399, %v932
        %v1433 = vsel %vm1415, %v1400, %v934
        %v1434 = vsel %vm1415, %v1401, %v936
        %v1435 = vsel %vm1415, %v1402, %v938
        %v1436 = vsel %vm1415, %v1403, %v940
        %v1437 = vsel %vm1415, %v1404, %v942
        %v1438 = vsel %vm1415, %v1405, %v944
        %v1439 = vsel %vm1415, %v1406, %v946
        %v1440 = vsel %vm1415, %v1407, %v948
        %v1441 = vsel %vm1415, %v1408, %v950
        %v1442 = vsel %vm1415, %v1409, %v952
        %v1443 = vsel %vm1415, %v1410, %v954
        %v1444 = vsel %vm1415, %v1411, %v956
        %v1445 = vsel %vm1415, %v1412, %v958
        %v1446 = vsel %vm1415, %v1413, %v960
        %v1447 = vsel %vm1415, %v1414, %v962
        %vm1448 = vcmask 195584
        %v1449 = vsel %vm1448, %v1416, %v996
        %v1450 = vsel %vm1448, %v1417, %v998
        %v1451 = vsel %vm1448, %v1418, %v1000
        %v1452 = vsel %vm1448, %v1419, %v1002
        %v1453 = vsel %vm1448, %v1420, %v1004
        %v1454 = vsel %vm1448, %v1421, %v1006
        %v1455 = vsel %vm1448, %v1422, %v1008
        %v1456 = vsel %vm1448, %v1423, %v1010
        %v1457 = vsel %vm1448, %v1424, %v1012
        %v1458 = vsel %vm1448, %v1425, %v1014
        %v1459 = vsel %vm1448, %v1426, %v1016
        %v1460 = vsel %vm1448, %v1427, %v1018
        %v1461 = vsel %vm1448, %v1428, %v1020
        %v1462 = vsel %vm1448, %v1429, %v1022
        %v1463 = vsel %vm1448, %v1430, %v1024
        %v1464 = vsel %vm1448, %v1431, %v1026
        %v1465 = vsel %vm1448, %v1432, %v1028
        %v1466 = vsel %vm1448, %v1433, %v1030
        %v1467 = vsel %vm1448, %v1434, %v1032
        %v1468 = vsel %vm1448, %v1435, %v1034
        %v1469 = vsel %vm1448, %v1436, %v1036
        %v1470 = vsel %vm1448, %v1437, %v1038
        %v1471 = vsel %vm1448, %v1438, %v1040
        %v1472 = vsel %vm1448, %v1439, %v1042
        %v1473 = vsel %vm1448, %v1440, %v1044
        %v1474 = vsel %vm1448, %v1441, %v1046
        %v1475 = vsel %vm1448, %v1442, %v1048
        %v1476 = vsel %vm1448, %v1443, %v1050
        %v1477 = vsel %vm1448, %v1444, %v1052
        %v1478 = vsel %vm1448, %v1445, %v1054
        %v1479 = vsel %vm1448, %v1446, %v1056
        %v1480 = vsel %vm1448, %v1447, %v1058
        %vm1481 = vcmask 228352
        %v1482 = vsel %vm1481, %v1449, %v1092
        %v1483 = vsel %vm1481, %v1450, %v1094
        %v1484 = vsel %vm1481, %v1451, %v1096
        %v1485 = vsel %vm1481, %v1452, %v1098
        %v1486 = vsel %vm1481, %v1453, %v1100
        %v1487 = vsel %vm1481, %v1454, %v1102
        %v1488 = vsel %vm1481, %v1455, %v1104
        %v1489 = vsel %vm1481, %v1456, %v1106
        %v1490 = vsel %vm1481, %v1457, %v1108
        %v1491 = vsel %vm1481, %v1458, %v1110
        %v1492 = vsel %vm1481, %v1459, %v1112
        %v1493 = vsel %vm1481, %v1460, %v1114
        %v1494 = vsel %vm1481, %v1461, %v1116
        %v1495 = vsel %vm1481, %v1462, %v1118
        %v1496 = vsel %vm1481, %v1463, %v1120
        %v1497 = vsel %vm1481, %v1464, %v1122
        %v1498 = vsel %vm1481, %v1465, %v1124
        %v1499 = vsel %vm1481, %v1466, %v1126
        %v1500 = vsel %vm1481, %v1467, %v1128
        %v1501 = vsel %vm1481, %v1468, %v1130
        %v1502 = vsel %vm1481, %v1469, %v1132
        %v1503 = vsel %vm1481, %v1470, %v1134
        %v1504 = vsel %vm1481, %v1471, %v1136
        %v1505 = vsel %vm1481, %v1472, %v1138
        %v1506 = vsel %vm1481, %v1473, %v1140
        %v1507 = vsel %vm1481, %v1474, %v1142
        %v1508 = vsel %vm1481, %v1475, %v1144
        %v1509 = vsel %vm1481, %v1476, %v1146
        %v1510 = vsel %vm1481, %v1477, %v1148
        %v1511 = vsel %vm1481, %v1478, %v1150
        %v1512 = vsel %vm1481, %v1479, %v1152
        %v1513 = vsel %vm1481, %v1480, %v1154
        %vm1514 = vcmask 261120
        %v1515 = vsel %vm1514, %v1482, %v1188
        %v1516 = vsel %vm1514, %v1483, %v1190
        %v1517 = vsel %vm1514, %v1484, %v1192
        %v1518 = vsel %vm1514, %v1485, %v1194
        %v1519 = vsel %vm1514, %v1486, %v1196
        %v1520 = vsel %vm1514, %v1487, %v1198
        %v1521 = vsel %vm1514, %v1488, %v1200
        %v1522 = vsel %vm1514, %v1489, %v1202
        %v1523 = vsel %vm1514, %v1490, %v1204
        %v1524 = vsel %vm1514, %v1491, %v1206
        %v1525 = vsel %vm1514, %v1492, %v1208
        %v1526 = vsel %vm1514, %v1493, %v1210
        %v1527 = vsel %vm1514, %v1494, %v1212
        %v1528 = vsel %vm1514, %v1495, %v1214
        %v1529 = vsel %vm1514, %v1496, %v1216
        %v1530 = vsel %vm1514, %v1497, %v1218
        %v1531 = vsel %vm1514, %v1498, %v1220
        %v1532 = vsel %vm1514, %v1499, %v1222
        %v1533 = vsel %vm1514, %v1500, %v1224
        %v1534 = vsel %vm1514, %v1501, %v1226
        %v1535 = vsel %vm1514, %v1502, %v1228
        %v1536 = vsel %vm1514, %v1503, %v1230
        %v1537 = vsel %vm1514, %v1504, %v1232
        %v1538 = vsel %vm1514, %v1505, %v1234
        %v1539 = vsel %vm1514, %v1506, %v1236
        %v1540 = vsel %vm1514, %v1507, %v1238
        %v1541 = vsel %vm1514, %v1508, %v1240
        %v1542 = vsel %vm1514, %v1509, %v1242
        %v1543 = vsel %vm1514, %v1510, %v1244
        %v1544 = vsel %vm1514, %v1511, %v1246
        %v1545 = vsel %vm1514, %v1512, %v1248
        %v1546 = vsel %vm1514, %v1513, %v1250
        %v1547 = vpack.c.bf16 %v1516, %v1515
        %v1548 = vpack.c.bf16 %v1518, %v1517
        %v1549 = vpack.c.bf16 %v1520, %v1519
        %v1550 = vpack.c.bf16 %v1522, %v1521
        %v1551 = vpack.c.bf16 %v1524, %v1523
        %v1552 = vpack.c.bf16 %v1526, %v1525
        %v1553 = vpack.c.bf16 %v1528, %v1527
        %v1554 = vpack.c.bf16 %v1530, %v1529
        %v1555 = vpack.c.bf16 %v1532, %v1531
        %v1556 = vpack.c.bf16 %v1534, %v1533
        %v1557 = vpack.c.bf16 %v1536, %v1535
        %v1558 = vpack.c.bf16 %v1538, %v1537
        %v1559 = vpack.c.bf16 %v1540, %v1539
        %v1560 = vpack.c.bf16 %v1542, %v1541
        %v1561 = vpack.c.bf16 %v1544, %v1543
        %v1562 = vpack.c.bf16 %v1546, %v1545
        %v1563 = vld [vmem:[%s1] sm:$0xf]
        %v1564 = vld [vmem:[%s1 + $0x4] sm:$0xf]
        %v1565 = vld [vmem:[%s1 + $0x8] sm:$0xf]
        %v1566 = vld [vmem:[%s1 + $0xc] sm:$0xf]
        %v1567 = vld [vmem:[%s1 + $0x10] sm:$0x3]
        %v1573 = vunpack.c.l.b16 %v1563
        %v1574 = vunpack.c.l.b16 %v1564
        %v1575 = vunpack.c.l.b16 %v1565
        %v1576 = vunpack.c.l.b16 %v1566
        %v1577 = vunpack.c.l.b16 %v1567
        %v1578 = vpack.c.b16 %v1574, %v1573
        %v1579 = vpack.c.b16 %v1576, %v1575
        %v1580 = vpack.c.b16 %v1577, %v1577
        %vm1583 = vcmask 293888
        %v1585 = vsel %vm1583, %v1547, 0
        %v1588 = vsel %vm1583, %v1548, 0
        %v1591 = vsel %vm1583, %v1549, 0
        %v1594 = vsel %vm1583, %v1550, 0
        %v1597 = vsel %vm1583, %v1551, 0
        %v1600 = vsel %vm1583, %v1552, 0
        %v1603 = vsel %vm1583, %v1553, 0
        %v1606 = vsel %vm1583, %v1554, 0
        %v1609 = vsel %vm1583, %v1555, 0
        %v1612 = vsel %vm1583, %v1556, 0
        %v1615 = vsel %vm1583, %v1557, 0
        %v1618 = vsel %vm1583, %v1558, 0
        %v1621 = vsel %vm1583, %v1559, 0
        %v1624 = vsel %vm1583, %v1560, 0
        %v1627 = vsel %vm1583, %v1561, 0
        %v1630 = vsel %vm1583, %v1562, 0
        %vm1632 = vcmask 1041408
        %v1634 = vsel %vm1632, %v1580, 0
        %1636 = vmatprep.subr.bf16.mxu0 0
        %1637 = vmatpush1.bf16.msra.mxu0 %v1578
        %1638 = vmatprep.subr.bf16.mxu0 0
        %1639 = vmatpush1.bf16.msra.mxu0 %v1579
        %1640 = vmatprep.subr.bf16.mxu0 0
        %1641 = vmatpush1.bf16.msra.mxu0 %v1634
        %1642 = vmatprep.subr.bf16.mxu0 0
        %1643 = vmatpush1.bf16.msra.mxu0 0
        %1644 = vmatprep.subr.bf16.mxu0 0
        %1645 = vmatpush1.bf16.msra.mxu0 0
        %1646 = vmatprep.subr.bf16.mxu0 0
        %1647 = vmatpush1.bf16.msra.mxu0 0
        %1648 = vmatprep.subr.bf16.mxu0 0
        %1649 = vmatpush1.bf16.msra.mxu0 0
        %1650 = vmatprep.subr.bf16.mxu0 0
        %1651 = vmatpush1.bf16.msra.mxu0 0
        %1652 = vmatprep.subr.bf16.mxu0 0
        %1653 = vmatpush1.bf16.msra.mxu0 0
        %1654 = vmatprep.subr.bf16.mxu0 0
        %1655 = vmatpush1.bf16.msra.mxu0 0
        %1656 = vmatprep.subr.bf16.mxu0 0
        %1657 = vmatpush1.bf16.msra.mxu0 0
        %1658 = vmatprep.subr.bf16.mxu0 0
        %1659 = vmatpush1.bf16.msra.mxu0 0
        %1660 = vmatprep.subr.bf16.mxu0 0
        %1661 = vmatpush1.bf16.msra.mxu0 0
        %1662 = vmatprep.subr.bf16.mxu0 0
        %1663 = vmatpush1.bf16.msra.mxu0 0
        %1664 = vmatprep.subr.bf16.mxu0 0
        %1665 = vmatpush1.bf16.msra.mxu0 0
        %1666 = vmatprep.subr.bf16.mxu0 0
        %1667 = vmatpush1.bf16.msra.mxu0 0
        %1668 = vmatprep.mubr.bf16.mxu0 0
        %1669 = vmatmul.mubr.bf16.gmra.mrb[0].mxu0 %v1585
        %v1670 = vpop.f32.mrb[0].mxu0
        %v1671 = vadd.f32 0.0, %v1670
        %v1672 = vpop.f32.mrb[0].mxu0
        %v1673 = vpop.f32.mrb[0].mxu0
        %v1674 = vadd.f32 0.0, %v1673
        %v1675 = vpop.f32.mrb[0].mxu0
        %1676 = vmatprep.mubr.bf16.mxu0 0
        %1677 = vmatmul.mubr.bf16.gmra.mrb[0].mxu0 %v1588
        %v1678 = vpop.f32.mrb[0].mxu0
        %v1679 = vadd.f32 0.0, %v1678
        %v1680 = vpop.f32.mrb[0].mxu0
        %v1681 = vpop.f32.mrb[0].mxu0
        %v1682 = vadd.f32 0.0, %v1681
        %v1683 = vpop.f32.mrb[0].mxu0
        %1684 = vmatprep.mubr.bf16.mxu0 0
        %1685 = vmatmul.mubr.bf16.gmra.mrb[0].mxu0 %v1591
        %v1686 = vpop.f32.mrb[0].mxu0
        %v1687 = vadd.f32 0.0, %v1686
        %v1688 = vpop.f32.mrb[0].mxu0
        %v1689 = vpop.f32.mrb[0].mxu0
        %v1690 = vadd.f32 0.0, %v1689
        %v1691 = vpop.f32.mrb[0].mxu0
        %1692 = vmatprep.mubr.bf16.mxu0 0
        %1693 = vmatmul.mubr.bf16.gmra.mrb[0].mxu0 %v1594
        %v1694 = vpop.f32.mrb[0].mxu0
        %v1695 = vadd.f32 0.0, %v1694
        %v1696 = vpop.f32.mrb[0].mxu0
        %v1697 = vpop.f32.mrb[0].mxu0
        %v1698 = vadd.f32 0.0, %v1697
        %v1699 = vpop.f32.mrb[0].mxu0
        %1700 = vmatprep.mubr.bf16.mxu0 0
        %1701 = vmatmul.mubr.bf16.gmra.mrb[0].mxu0 %v1597
        %v1702 = vpop.f32.mrb[0].mxu0
        %v1703 = vadd.f32 0.0, %v1702
        %v1704 = vpop.f32.mrb[0].mxu0
        %v1705 = vpop.f32.mrb[0].mxu0
        %v1706 = vadd.f32 0.0, %v1705
        %v1707 = vpop.f32.mrb[0].mxu0
        %1708 = vmatprep.mubr.bf16.mxu0 0
        %1709 = vmatmul.mubr.bf16.gmra.mrb[0].mxu0 %v1600
        %v1710 = vpop.f32.mrb[0].mxu0
        %v1711 = vadd.f32 0.0, %v1710
        %v1712 = vpop.f32.mrb[0].mxu0
        %v1713 = vpop.f32.mrb[0].mxu0
        %v1714 = vadd.f32 0.0, %v1713
        %v1715 = vpop.f32.mrb[0].mxu0
        %1716 = vmatprep.mubr.bf16.mxu0 0
        %1717 = vmatmul.mubr.bf16.gmra.mrb[0].mxu0 %v1603
        %v1718 = vpop.f32.mrb[0].mxu0
        %v1719 = vadd.f32 0.0, %v1718
        %v1720 = vpop.f32.mrb[0].mxu0
        %v1721 = vpop.f32.mrb[0].mxu0
        %v1722 = vadd.f32 0.0, %v1721
        %v1723 = vpop.f32.mrb[0].mxu0
        %1724 = vmatprep.mubr.bf16.mxu0 0
        %1725 = vmatmul.mubr.bf16.gmra.mrb[0].mxu0 %v1606
        %v1726 = vpop.f32.mrb[0].mxu0
        %v1727 = vadd.f32 0.0, %v1726
        %v1728 = vpop.f32.mrb[0].mxu0
        %v1729 = vpop.f32.mrb[0].mxu0
        %v1730 = vadd.f32 0.0, %v1729
        %v1731 = vpop.f32.mrb[0].mxu0
        %1732 = vmatprep.mubr.bf16.mxu0 0
        %1733 = vmatmul.mubr.bf16.gmra.mrb[0].mxu0 %v1609
        %v1734 = vpop.f32.mrb[0].mxu0
        %v1735 = vadd.f32 0.0, %v1734
        %v1736 = vpop.f32.mrb[0].mxu0
        %v1737 = vpop.f32.mrb[0].mxu0
        %v1738 = vadd.f32 0.0, %v1737
        %v1739 = vpop.f32.mrb[0].mxu0
        %1740 = vmatprep.mubr.bf16.mxu0 0
        %1741 = vmatmul.mubr.bf16.gmra.mrb[0].mxu0 %v1612
        %v1742 = vpop.f32.mrb[0].mxu0
        %v1743 = vadd.f32 0.0, %v1742
        %v1744 = vpop.f32.mrb[0].mxu0
        %v1745 = vpop.f32.mrb[0].mxu0
        %v1746 = vadd.f32 0.0, %v1745
        %v1747 = vpop.f32.mrb[0].mxu0
        %1748 = vmatprep.mubr.bf16.mxu0 0
        %1749 = vmatmul.mubr.bf16.gmra.mrb[0].mxu0 %v1615
        %v1750 = vpop.f32.mrb[0].mxu0
        %v1751 = vadd.f32 0.0, %v1750
        %v1752 = vpop.f32.mrb[0].mxu0
        %v1753 = vpop.f32.mrb[0].mxu0
        %v1754 = vadd.f32 0.0, %v1753
        %v1755 = vpop.f32.mrb[0].mxu0
        %1756 = vmatprep.mubr.bf16.mxu0 0
        %1757 = vmatmul.mubr.bf16.gmra.mrb[0].mxu0 %v1618
        %v1758 = vpop.f32.mrb[0].mxu0
        %v1759 = vadd.f32 0.0, %v1758
        %v1760 = vpop.f32.mrb[0].mxu0
        %v1761 = vpop.f32.mrb[0].mxu0
        %v1762 = vadd.f32 0.0, %v1761
        %v1763 = vpop.f32.mrb[0].mxu0
        %1764 = vmatprep.mubr.bf16.mxu0 0
        %1765 = vmatmul.mubr.bf16.gmra.mrb[0].mxu0 %v1621
        %v1766 = vpop.f32.mrb[0].mxu0
        %v1767 = vadd.f32 0.0, %v1766
        %v1768 = vpop.f32.mrb[0].mxu0
        %v1769 = vpop.f32.mrb[0].mxu0
        %v1770 = vadd.f32 0.0, %v1769
        %v1771 = vpop.f32.mrb[0].mxu0
        %1772 = vmatprep.mubr.bf16.mxu0 0
        %1773 = vmatmul.mubr.bf16.gmra.mrb[0].mxu0 %v1624
        %v1774 = vpop.f32.mrb[0].mxu0
        %v1775 = vadd.f32 0.0, %v1774
        %v1776 = vpop.f32.mrb[0].mxu0
        %v1777 = vpop.f32.mrb[0].mxu0
        %v1778 = vadd.f32 0.0, %v1777
        %v1779 = vpop.f32.mrb[0].mxu0
        %1780 = vmatprep.mubr.bf16.mxu0 0
        %1781 = vmatmul.mubr.bf16.gmra.mrb[0].mxu0 %v1627
        %v1782 = vpop.f32.mrb[0].mxu0
        %v1783 = vadd.f32 0.0, %v1782
        %v1784 = vpop.f32.mrb[0].mxu0
        %v1785 = vpop.f32.mrb[0].mxu0
        %v1786 = vadd.f32 0.0, %v1785
        %v1787 = vpop.f32.mrb[0].mxu0
        %1788 = vmatprep.mubr.bf16.mxu0 0
        %1789 = vmatmul.mubr.bf16.gmra.mrb[0].mxu0 %v1630
        %v1790 = vpop.f32.mrb[0].mxu0
        %v1791 = vadd.f32 0.0, %v1790
        %v1792 = vpop.f32.mrb[0].mxu0
        %v1793 = vpop.f32.mrb[0].mxu0
        %v1794 = vadd.f32 0.0, %v1793
        %v1795 = vpop.f32.mrb[0].mxu0
        %1796 = vdwg.mxu0
        %v1797 = vadd.f32 %v1671, %v1674
        %v1798 = vadd.f32 %v1797, %v1679
        %v1799 = vadd.f32 %v1798, %v1682
        %v1800 = vadd.f32 %v1799, %v1687
        %v1801 = vadd.f32 %v1800, %v1690
        %v1802 = vadd.f32 %v1801, %v1695
        %v1803 = vadd.f32 %v1802, %v1698
        %v1804 = vadd.f32 %v1803, %v1703
        %v1805 = vadd.f32 %v1804, %v1706
        %v1806 = vadd.f32 %v1805, %v1711
        %v1807 = vadd.f32 %v1806, %v1714
        %v1808 = vadd.f32 %v1807, %v1719
        %v1809 = vadd.f32 %v1808, %v1722
        %v1810 = vadd.f32 %v1809, %v1727
        %v1811 = vadd.f32 %v1810, %v1730
        %v1812 = vadd.f32 %v1811, %v1735
        %v1813 = vadd.f32 %v1812, %v1738
        %v1814 = vadd.f32 %v1813, %v1743
        %v1815 = vadd.f32 %v1814, %v1746
        %v1816 = vadd.f32 %v1815, %v1751
        %v1817 = vadd.f32 %v1816, %v1754
        %v1818 = vadd.f32 %v1817, %v1759
        %v1819 = vadd.f32 %v1818, %v1762
        %v1820 = vadd.f32 %v1819, %v1767
        %v1821 = vadd.f32 %v1820, %v1770
        %v1822 = vadd.f32 %v1821, %v1775
        %v1823 = vadd.f32 %v1822, %v1778
        %v1824 = vadd.f32 %v1823, %v1783
        %v1825 = vadd.f32 %v1824, %v1786
        %v1826 = vadd.f32 %v1825, %v1791
        %v1827 = vadd.f32 %v1826, %v1794
        %v1828 = vrot.slane %v1827, 4
        %v1829 = vadd.f32 %v1827, %v1828
        %v1830 = vrot.slane %v1829, 2
        %v1831 = vadd.f32 %v1829, %v1830
        %v1832 = vrot.slane %v1831, 1
        %v1833 = vadd.f32 %v1831, %v1832
        %v1834 = vmul.f32 %v1833, 0.00390625
        %v1835 = vsub.f32 %v1671, %v1834
        %v1836 = vsub.f32 %v1674, %v1834
        %v1837 = vsub.f32 %v1679, %v1834
        %v1838 = vsub.f32 %v1682, %v1834
        %v1839 = vsub.f32 %v1687, %v1834
        %v1840 = vsub.f32 %v1690, %v1834
        %v1841 = vsub.f32 %v1695, %v1834
        %v1842 = vsub.f32 %v1698, %v1834
        %v1843 = vsub.f32 %v1703, %v1834
        %v1844 = vsub.f32 %v1706, %v1834
        %v1845 = vsub.f32 %v1711, %v1834
        %v1846 = vsub.f32 %v1714, %v1834
        %v1847 = vsub.f32 %v1719, %v1834
        %v1848 = vsub.f32 %v1722, %v1834
        %v1849 = vsub.f32 %v1727, %v1834
        %v1850 = vsub.f32 %v1730, %v1834
        %v1851 = vsub.f32 %v1735, %v1834
        %v1852 = vsub.f32 %v1738, %v1834
        %v1853 = vsub.f32 %v1743, %v1834
        %v1854 = vsub.f32 %v1746, %v1834
        %v1855 = vsub.f32 %v1751, %v1834
        %v1856 = vsub.f32 %v1754, %v1834
        %v1857 = vsub.f32 %v1759, %v1834
        %v1858 = vsub.f32 %v1762, %v1834
        %v1859 = vsub.f32 %v1767, %v1834
        %v1860 = vsub.f32 %v1770, %v1834
        %v1861 = vsub.f32 %v1775, %v1834
        %v1862 = vsub.f32 %v1778, %v1834
        %v1863 = vsub.f32 %v1783, %v1834
        %v1864 = vsub.f32 %v1786, %v1834
        %v1865 = vsub.f32 %v1791, %v1834
        %v1866 = vsub.f32 %v1794, %v1834
        %v1867 = vmul.f32 %v1835, %v1835
        %v1868 = vmul.f32 %v1836, %v1836
        %v1869 = vmul.f32 %v1837, %v1837
        %v1870 = vmul.f32 %v1838, %v1838
        %v1871 = vmul.f32 %v1839, %v1839
        %v1872 = vmul.f32 %v1840, %v1840
        %v1873 = vmul.f32 %v1841, %v1841
        %v1874 = vmul.f32 %v1842, %v1842
        %v1875 = vmul.f32 %v1843, %v1843
        %v1876 = vmul.f32 %v1844, %v1844
        %v1877 = vmul.f32 %v1845, %v1845
        %v1878 = vmul.f32 %v1846, %v1846
        %v1879 = vmul.f32 %v1847, %v1847
        %v1880 = vmul.f32 %v1848, %v1848
        %v1881 = vmul.f32 %v1849, %v1849
        %v1882 = vmul.f32 %v1850, %v1850
        %v1883 = vmul.f32 %v1851, %v1851
        %v1884 = vmul.f32 %v1852, %v1852
        %v1885 = vmul.f32 %v1853, %v1853
        %v1886 = vmul.f32 %v1854, %v1854
        %v1887 = vmul.f32 %v1855, %v1855
        %v1888 = vmul.f32 %v1856, %v1856
        %v1889 = vmul.f32 %v1857, %v1857
        %v1890 = vmul.f32 %v1858, %v1858
        %v1891 = vmul.f32 %v1859, %v1859
        %v1892 = vmul.f32 %v1860, %v1860
        %v1893 = vmul.f32 %v1861, %v1861
        %v1894 = vmul.f32 %v1862, %v1862
        %v1895 = vmul.f32 %v1863, %v1863
        %v1896 = vmul.f32 %v1864, %v1864
        %v1897 = vmul.f32 %v1865, %v1865
        %v1898 = vmul.f32 %v1866, %v1866
        %v1899 = vadd.f32 %v1867, %v1868
        %v1900 = vadd.f32 %v1899, %v1869
        %v1901 = vadd.f32 %v1900, %v1870
        %v1902 = vadd.f32 %v1901, %v1871
        %v1903 = vadd.f32 %v1902, %v1872
        %v1904 = vadd.f32 %v1903, %v1873
        %v1905 = vadd.f32 %v1904, %v1874
        %v1906 = vadd.f32 %v1905, %v1875
        %v1907 = vadd.f32 %v1906, %v1876
        %v1908 = vadd.f32 %v1907, %v1877
        %v1909 = vadd.f32 %v1908, %v1878
        %v1910 = vadd.f32 %v1909, %v1879
        %v1911 = vadd.f32 %v1910, %v1880
        %v1912 = vadd.f32 %v1911, %v1881
        %v1913 = vadd.f32 %v1912, %v1882
        %v1914 = vadd.f32 %v1913, %v1883
        %v1915 = vadd.f32 %v1914, %v1884
        %v1916 = vadd.f32 %v1915, %v1885
        %v1917 = vadd.f32 %v1916, %v1886
        %v1918 = vadd.f32 %v1917, %v1887
        %v1919 = vadd.f32 %v1918, %v1888
        %v1920 = vadd.f32 %v1919, %v1889
        %v1921 = vadd.f32 %v1920, %v1890
        %v1922 = vadd.f32 %v1921, %v1891
        %v1923 = vadd.f32 %v1922, %v1892
        %v1924 = vadd.f32 %v1923, %v1893
        %v1925 = vadd.f32 %v1924, %v1894
        %v1926 = vadd.f32 %v1925, %v1895
        %v1927 = vadd.f32 %v1926, %v1896
        %v1928 = vadd.f32 %v1927, %v1897
        %v1929 = vadd.f32 %v1928, %v1898
        %v1930 = vrot.slane %v1929, 4
        %v1931 = vadd.f32 %v1929, %v1930
        %v1932 = vrot.slane %v1931, 2
        %v1933 = vadd.f32 %v1931, %v1932
        %v1934 = vrot.slane %v1933, 1
        %v1935 = vadd.f32 %v1933, %v1934
        %vm1936 = vcmask 1040384
        %v1937 = vsel %vm1936, %v1833, %v1935
        %1938 = vst [vmem:[%s160] sm:$0x3] %v1937
        %s1939 = sand.u32 %s87, 1
        %s1940 = scalar_lea.sflag [#allocation3], %s1939
        %s1941 = sand.u32 %s87, 1
        %s1942 = smul.addr %s1941, 2
        %s1943 = scalar_lea.vmem [#allocation2], %s1942
        // Predicated region
        $region29: #{tpu_custom_call.1} parent=27 // pred_check
          %p1944 = pneg %p97
        $region30: #{tpu_custom_call.1} parent=27 // pred_check_branch
          %1946 = sbr.rel (%p1944) target = $region32
        $region31: #{tpu_custom_call.1} parent=27 // pred_region
          %s1948 = ssub.s32 32, 32
          %1949 = vsyncadd %s1940, %s1948
          %s1950 = sadd.s32 %s21, %s20
          %s1951 = smul.addr %s1950, 32
          %s1952 = scalar_lea.hbm %s2, %s1951
          %s1954 = sshll.u32 %s1943, 4
          %s1955 = int_to_ptr.vmem [resolvable:$true] %s1954
          %1957 = dma.vmem_to_hbm [thread:$0]  %s1955, 32, %s1952, %s1940
        $region32: #{tpu_custom_call.1} parent=27 // pred_fallthru
          _
      $region28: #{tpu_custom_call.1} parent=5 // pred_fallthru
        _
      %p1958 = scmp.le.s32.totalorder 2, %s11
      // Predicated region
      $region33: #{tpu_custom_call.1} parent=5 // pred_check
        %p1959 = pneg %p1958
      $region34: #{tpu_custom_call.1} parent=5 // pred_check_branch
        %1961 = sbr.rel (%p1959) target = $region36
      $region35: #{tpu_custom_call.1} parent=5 // pred_region
        %s1962 = ssub.s32 %s11, 2
        // Predicated region
        $region37: #{tpu_custom_call.1} parent=35 // pred_check
          %p1963 = pneg %p103
        $region38: #{tpu_custom_call.1} parent=35 // pred_check_branch
          %1965 = sbr.rel (%p1963) target = $region40
        $region39: #{tpu_custom_call.1} parent=35 // pred_region
          %s1966 = sand.u32 %s88, 1
          %s1967 = scalar_lea.sflag [#allocation3], %s1966
          %s1968 = sand.u32 %s88, 1
          %s1969 = smul.addr %s1968, 2
          %s1970 = scalar_lea.vmem [#allocation2], %s1969
          %1971 = dma.done %s1967, 32
        $region40: #{tpu_custom_call.1} parent=35 // pred_fallthru
          _
      $region36: #{tpu_custom_call.1} parent=5 // pred_fallthru
        _
    $region6: #{tpu_custom_call.1} parent=1 // loop_footer
      %s15 = sadd.s32 1, %s11
    $region7: #{tpu_custom_call.1} parent=1 // loop_footer_branch
      %10 = sbr.rel target = $region3
    $region8: #{tpu_custom_call.1} parent=1 // loop_exit
      _
    %1972 = vsyncpa [#allocation3], 1
    %s1973 = scalar_lea.sflag [#allocation3], 1
    %1974 = vsyncpa %s1973, 1

</llo_original>
